<compile_context>
chip_gen: v7x
topology: tpu7x:2x2x1
jax: 0.10.0
libtpu: 0.0.40
codegen_flags: <defaults>
</compile_context>

<pallas_src>
import math
import functools

import jax
import jax.numpy as jnp
from jax.experimental import pallas as pl
from jax.experimental.pallas import tpu as pltpu


# ---------------------------------------------------------------------------
# Kernel bodies
# ---------------------------------------------------------------------------

def _attention_core(q, k, v, wo_ref, bo_ref, o_ref, *,
                    num_heads, head_dim, block_b, seq_len):
    """Per-head scaled-dot-product attention + fused output projection.

    q/k/v: (rows, E) bf16 values (softmax scale already folded into q via the
    q-projection weights).  Scores / softmax stay in f32 (v5e VPU/EUP have no
    bf16); the softmax denominator uses the otherwise-idle EUP approx
    reciprocal.  Head contexts are concatenated into one lane-dense (rows, E)
    bf16 value and pushed through a single K=E output matmul.
    """
    embed = num_heads * head_dim
    rows = block_b * seq_len

    ctx_heads = []
    for h in range(num_heads):
        lo = h * head_dim
        hi = lo + head_dim
        q_h = q[:, lo:hi].reshape(block_b, seq_len, head_dim)
        k_h = k[:, lo:hi].reshape(block_b, seq_len, head_dim)
        v_h = v[:, lo:hi].reshape(block_b, seq_len, head_dim)

        s = jnp.einsum('bqd,bkd->bqk', q_h, k_h,
                       preferred_element_type=jnp.float32)
        s = s - jnp.max(s, axis=-1, keepdims=True)
        p = jnp.exp(s)
        p = p * pl.reciprocal(jnp.sum(p, axis=-1, keepdims=True), approx=True)

        ctx = jnp.einsum('bqk,bkd->bqd', p.astype(jnp.bfloat16), v_h,
                         preferred_element_type=jnp.float32)
        ctx_heads.append(ctx.reshape(rows, head_dim).astype(jnp.bfloat16))

    # Fused "concat heads + output linear": one full-depth (K=E) MXU matmul.
    ctx_all = jnp.concatenate(ctx_heads, axis=-1)                 # (rows, E) bf16
    out = jnp.dot(ctx_all, wo_ref[...],
                  preferred_element_type=jnp.float32) + bo_ref[...]
    o_ref[...] = out.reshape(block_b, seq_len, embed).astype(o_ref.dtype)


def _mha_kernel(q_in, k_in, v_in, wq, wk, wv, wo, bq, bk, bv, bo, o_ref, *,
                num_heads, head_dim, block_b, seq_len):
    """General path: distinct query / key / value inputs."""
    embed = num_heads * head_dim
    rows = block_b * seq_len

    xq = q_in[...].reshape(rows, embed)   # already bf16 (cast in the wrapper)
    xk = k_in[...].reshape(rows, embed)
    xv = v_in[...].reshape(rows, embed)

    # Pre-transposed bf16 (in,out) weights -> plain [M,K]x[K,N] MXU feeds with
    # f32 accumulation and f32 bias add; then ONE cast to bf16 per tensor.
    q = (jnp.dot(xq, wq[...], preferred_element_type=jnp.float32)
         + bq[...]).astype(jnp.bfloat16)
    k = (jnp.dot(xk, wk[...], preferred_element_type=jnp.float32)
         + bk[...]).astype(jnp.bfloat16)
    v = (jnp.dot(xv, wv[...], preferred_element_type=jnp.float32)
         + bv[...]).astype(jnp.bfloat16)

    _attention_core(q, k, v, wo, bo, o_ref, num_heads=num_heads,
                    head_dim=head_dim, block_b=block_b, seq_len=seq_len)


def _mha_self_kernel(x_in, wqkv, wo, bqkv, bo, o_ref, *,
                     num_heads, head_dim, block_b, seq_len):
    """Self-attention fast path: one input DMA, one fused (E,3E) projection."""
    embed = num_heads * head_dim
    rows = block_b * seq_len

    x = x_in[...].reshape(rows, embed)
    qkv = (jnp.dot(x, wqkv[...], preferred_element_type=jnp.float32)
           + bqkv[...]).astype(jnp.bfloat16)
    q = qkv[:, 0:embed]              # lane-aligned slices (offsets multiple of E)
    k = qkv[:, embed:2 * embed]
    v = qkv[:, 2 * embed:3 * embed]

    _attention_core(q, k, v, wo, bo, o_ref, num_heads=num_heads,
                    head_dim=head_dim, block_b=block_b, seq_len=seq_len)


# ---------------------------------------------------------------------------
# Generation-aware launch policy
# ---------------------------------------------------------------------------

def _device_policy():
    """Returns (min_grid_steps, vmem_limit_bytes) per TPU generation."""
    kind = ""
    try:
        kind = jax.devices()[0].device_kind.lower()
    except Exception:
        pass
    if "v7" in kind:
        # 2 TensorCores/chip, 64 MiB VMEM/core: want >= 2 steps per core so
        # BlockSpec prefetch can hide DMA; de-rate the VMEM limit.
        return 4, 40 * 1024 * 1024
    # v5e / v6e: single TC, 128 MiB VMEM -> biggest block, generous limit.
    return 1, 100 * 1024 * 1024


def _vmem_estimate(block_b, seq_len, embed, num_heads, n_seq_inputs,
                   out_itemsize):
    """Rough per-grid-step VMEM footprint (pipeline buffers + kernel values)."""
    rows = block_b * seq_len
    est = n_seq_inputs * rows * embed * 2 * 2          # bf16 input blocks, double-buffered
    est += rows * embed * out_itemsize * 2             # output block, double-buffered
    est += (3 * embed * embed * 2 * 2) * 2             # bf16 weights (qkv + wo), double-buffered
    est += 4 * embed * 4 * 2                           # f32 biases
    est += 3 * rows * embed * (4 + 2)                  # f32 proj results + bf16 q/k/v
    est += rows * embed * (2 + 4)                      # bf16 concat ctx + f32 out
    est += 2 * block_b * seq_len * seq_len * 4         # f32 score / prob tiles
    return est


def _pick_block_b(batch, seq_len, embed, num_heads, n_seq_inputs,
                  out_itemsize, min_steps, vmem_budget):
    divisors = [d for d in range(batch, 0, -1) if batch % d == 0]

    def fits(d):
        return _vmem_estimate(d, seq_len, embed, num_heads, n_seq_inputs,
                              out_itemsize) <= vmem_budget

    for want_steps in (min_steps, min(min_steps, batch), 1):
        for d in divisors:
            if (batch // d) >= want_steps and fits(d):
                return d
    return 1


# ---------------------------------------------------------------------------
# Wrapper
# ---------------------------------------------------------------------------

def multi_head_attention(queries, keys, values, params, *, num_heads,
                         block_b=None, out_dtype=jnp.bfloat16):
    B, S, E = queries.shape
    assert E % num_heads == 0
    head_dim = E // num_heads
    # Reference module: dk = latent_size (NOT head_dim) -- intentional.
    scale = 1.0 / math.sqrt(E)

    wq, bq, wk, bk, wv, bv, wo, bo = params

    # Pre-transpose nn.Linear (out,in) weights to (in,out), cast to bf16, and
    # fold the softmax scale into the q weights *and* q bias.
    wq_t = jnp.asarray(wq.T * scale, jnp.bfloat16)
    wk_t = jnp.asarray(wk.T, jnp.bfloat16)
    wv_t = jnp.asarray(wv.T, jnp.bfloat16)
    wo_t = jnp.asarray(wo.T, jnp.bfloat16)
    bq_s = jnp.asarray(bq, jnp.float32).reshape(1, E) * scale
    bk_f = jnp.asarray(bk, jnp.float32).reshape(1, E)
    bv_f = jnp.asarray(bv, jnp.float32).reshape(1, E)
    bo_f = jnp.asarray(bo, jnp.float32).reshape(1, E)

    self_attention = (queries is keys) and (queries is values)
    n_seq_inputs = 1 if self_attention else 3

    min_steps, vmem_limit = _device_policy()
    if block_b is None:
        block_b = _pick_block_b(B, S, E, num_heads, n_seq_inputs,
                                jnp.dtype(out_dtype).itemsize, min_steps,
                                int(0.75 * vmem_limit))
    assert B % block_b == 0, "batch must be divisible by block_b"
    grid_b = B // block_b

    seq_spec = pl.BlockSpec((block_b, S, E), lambda b: (b, 0, 0))
    out_spec = pl.BlockSpec((block_b, S, E), lambda b: (b, 0, 0))
    w_spec = pl.BlockSpec((E, E), lambda b: (0, 0))
    bias_spec = pl.BlockSpec((1, E), lambda b: (0, 0))

    compiler_params = pltpu.CompilerParams(
        dimension_semantics=("parallel",),
        vmem_limit_bytes=vmem_limit)

    if self_attention:
        wqkv_t = jnp.concatenate([wq_t, wk_t, wv_t], axis=1)       # (E, 3E)
        bqkv = jnp.concatenate([bq_s, bk_f, bv_f], axis=1)         # (1, 3E)
        kernel = functools.partial(_mha_self_kernel, num_heads=num_heads,
                                   head_dim=head_dim, block_b=block_b,
                                   seq_len=S)
        grid_spec = pltpu.PrefetchScalarGridSpec(
            num_scalar_prefetch=0, grid=(grid_b,),
            in_specs=[seq_spec,
                      pl.BlockSpec((E, 3 * E), lambda b: (0, 0)),
                      w_spec,
                      pl.BlockSpec((1, 3 * E), lambda b: (0, 0)),
                      bias_spec],
            out_specs=out_spec)
        return pl.pallas_call(
            kernel,
            out_shape=jax.ShapeDtypeStruct((B, S, E), out_dtype),
            grid_spec=grid_spec,
            compiler_params=compiler_params,
        )(queries.astype(jnp.bfloat16), wqkv_t, wo_t, bqkv, bo_f)

    kernel = functools.partial(_mha_kernel, num_heads=num_heads,
                               head_dim=head_dim, block_b=block_b, seq_len=S)
    grid_spec = pltpu.PrefetchScalarGridSpec(
        num_scalar_prefetch=0, grid=(grid_b,),
        in_specs=[seq_spec, seq_spec, seq_spec,
                  w_spec, w_spec, w_spec, w_spec,
                  bias_spec, bias_spec, bias_spec, bias_spec],
        out_specs=out_spec)
    return pl.pallas_call(
        kernel,
        out_shape=jax.ShapeDtypeStruct((B, S, E), out_dtype),
        grid_spec=grid_spec,
        compiler_params=compiler_params,
    )(queries.astype(jnp.bfloat16), keys.astype(jnp.bfloat16),
      values.astype(jnp.bfloat16),
      wq_t, wk_t, wv_t, wo_t, bq_s, bk_f, bv_f, bo_f)


# ---------------------------------------------------------------------------
# Reference + demo
# ---------------------------------------------------------------------------

def init_linear(key, in_f, out_f):
    # PyTorch nn.Linear default init: U(-1/sqrt(in_f), 1/sqrt(in_f))
    kw, kb = jax.random.split(key)
    bound = 1.0 / math.sqrt(in_f)
    w = jax.random.uniform(kw, (out_f, in_f), jnp.float32, -bound, bound)
    b = jax.random.uniform(kb, (1, out_f), jnp.float32, -bound, bound)
    return w, b


def reference_mha(queries, keys, values, params, *, num_heads):
    # Pure-JAX (f32) transcription of the PyTorch forward, for verification.
    wq, bq, wk, bk, wv, bv, wo, bo = params
    B, S, E = queries.shape
    Dh = E // num_heads
    scale = 1.0 / math.sqrt(E)

    q = queries @ wq.T + bq[0]
    k = keys @ wk.T + bk[0]
    v = values @ wv.T + bv[0]

    q = q.reshape(B, S, num_heads, Dh).transpose(0, 2, 1, 3)  # (B,H,S,Dh)
    k = k.reshape(B, S, num_heads, Dh).transpose(0, 2, 1, 3)  # (B,H,S,Dh)
    v = v.reshape(B, S, num_heads, Dh)                        # (B,S,H,Dh)

    compat = jnp.einsum('bhqd,bhkd->bhqk', q, k) * scale
    attn = jax.nn.softmax(compat, axis=3)
    v_t = v.transpose(0, 2, 1, 3)                             # (B,H,S,Dh)
    sdp = jnp.einsum('bhqk,bhkd->bhqd', attn, v_t)            # (B,H,S,Dh)
    sdp = sdp.transpose(0, 2, 1, 3).reshape(B, S, E)
    return sdp @ wo.T + bo[0]


if __name__ == "__main__":
    # Small shapes consistent with the module (latent_size=768, num_heads=12,
    # batch_size=8 -- scaled down).
    B, S, E, H = 2, 8, 32, 4

    key = jax.random.PRNGKey(0)
    kq, kk, kv, ko, kxq, kxk, kxv = jax.random.split(key, 7)

    wq, bq = init_linear(kq, E, E)
    wk, bk = init_linear(kk, E, E)
    wv, bv = init_linear(kv, E, E)
    wo, bo = init_linear(ko, E, E)
    params = (wq, bq, wk, bk, wv, bv, wo, bo)

    queries = jax.random.normal(kxq, (B, S, E), jnp.float32)
    keys = jax.random.normal(kxk, (B, S, E), jnp.float32)
    values = jax.random.normal(kxv, (B, S, E), jnp.float32)

    # General (distinct q/k/v) path.
    out = multi_head_attention(queries, keys, values, params, num_heads=H)
    out = jax.block_until_ready(out)
    ref = reference_mha(queries, keys, values, params, num_heads=H)
    assert out.shape == (B, S, E)
    # bf16 MXU operands / bf16 output (f32 accumulation + softmax) -> loose tol.
    assert jnp.allclose(out.astype(jnp.float32), ref, atol=5e-2, rtol=5e-2), \
        "mismatch vs JAX reference (general path)"

    # Self-attention fast path (fused QKV) -- the ViT usage pattern.
    out_sa = multi_head_attention(queries, queries, queries, params, num_heads=H)
    out_sa = jax.block_until_ready(out_sa)
    ref_sa = reference_mha(queries, queries, queries, params, num_heads=H)
    assert jnp.allclose(out_sa.astype(jnp.float32), ref_sa, atol=5e-2, rtol=5e-2), \
        "mismatch vs JAX reference (self-attention path)"

    print("KERNEL_OK")
</pallas_src>

<mosaic_0001>
module attributes {stable_mosaic.version = 11 : i64} {
  func.func @_mha_kernel(%arg0: i32, %arg1: memref<2x8x32xbf16, #tpu.memory_space<vmem>>, %arg2: memref<2x8x32xbf16, #tpu.memory_space<vmem>>, %arg3: memref<2x8x32xbf16, #tpu.memory_space<vmem>>, %arg4: memref<32x32xbf16, #tpu.memory_space<vmem>>, %arg5: memref<32x32xbf16, #tpu.memory_space<vmem>>, %arg6: memref<32x32xbf16, #tpu.memory_space<vmem>>, %arg7: memref<32x32xbf16, #tpu.memory_space<vmem>>, %arg8: memref<1x32xf32, #tpu.memory_space<vmem>>, %arg9: memref<1x32xf32, #tpu.memory_space<vmem>>, %arg10: memref<1x32xf32, #tpu.memory_space<vmem>>, %arg11: memref<1x32xf32, #tpu.memory_space<vmem>>, %arg12: memref<2x8x32xbf16, #tpu.memory_space<vmem>>) attributes {dimension_semantics = [#tpu.dimension_semantics<parallel>], iteration_bounds = array<i64: 1>, scalar_prefetch = 0 : i64, scratch_operands = 0 : i64, tpu.core_type = #tpu.core_type<tc>, window_params = [{transform_indices = @transform_0, window_bounds = array<i64: 2, 8, 32>}, {transform_indices = @transform_1, window_bounds = array<i64: 2, 8, 32>}, {transform_indices = @transform_2, window_bounds = array<i64: 2, 8, 32>}, {pipeline_mode = #tpu.pipeline_mode<synchronous>, transform_indices = @transform_3, window_bounds = array<i64: 32, 32>}, {pipeline_mode = #tpu.pipeline_mode<synchronous>, transform_indices = @transform_4, window_bounds = array<i64: 32, 32>}, {pipeline_mode = #tpu.pipeline_mode<synchronous>, transform_indices = @transform_5, window_bounds = array<i64: 32, 32>}, {pipeline_mode = #tpu.pipeline_mode<synchronous>, transform_indices = @transform_6, window_bounds = array<i64: 32, 32>}, {pipeline_mode = #tpu.pipeline_mode<synchronous>, transform_indices = @transform_7, window_bounds = array<i64: 1, 32>}, {pipeline_mode = #tpu.pipeline_mode<synchronous>, transform_indices = @transform_8, window_bounds = array<i64: 1, 32>}, {pipeline_mode = #tpu.pipeline_mode<synchronous>, transform_indices = @transform_9, window_bounds = array<i64: 1, 32>}, {pipeline_mode = #tpu.pipeline_mode<synchronous>, transform_indices = @transform_10, window_bounds = array<i64: 1, 32>}, {transform_indices = @transform_11, window_bounds = array<i64: 2, 8, 32>}]} {
    %c0 = arith.constant 0 : index
    %c0_0 = arith.constant 0 : index
    %c0_1 = arith.constant 0 : index
    %0 = vector.load %arg1[%c0, %c0_0, %c0_1] : memref<2x8x32xbf16, #tpu.memory_space<vmem>>, vector<2x8x32xbf16>
    %1 = vector.shape_cast %0 : vector<2x8x32xbf16> to vector<16x32xbf16>
    %c0_2 = arith.constant 0 : index
    %c0_3 = arith.constant 0 : index
    %c0_4 = arith.constant 0 : index
    %2 = vector.load %arg2[%c0_2, %c0_3, %c0_4] : memref<2x8x32xbf16, #tpu.memory_space<vmem>>, vector<2x8x32xbf16>
    %3 = vector.shape_cast %2 : vector<2x8x32xbf16> to vector<16x32xbf16>
    %c0_5 = arith.constant 0 : index
    %c0_6 = arith.constant 0 : index
    %c0_7 = arith.constant 0 : index
    %4 = vector.load %arg3[%c0_5, %c0_6, %c0_7] : memref<2x8x32xbf16, #tpu.memory_space<vmem>>, vector<2x8x32xbf16>
    %5 = vector.shape_cast %4 : vector<2x8x32xbf16> to vector<16x32xbf16>
    %c0_8 = arith.constant 0 : index
    %c0_9 = arith.constant 0 : index
    %6 = vector.load %arg4[%c0_8, %c0_9] : memref<32x32xbf16, #tpu.memory_space<vmem>>, vector<32x32xbf16>
    %cst = arith.constant dense<0.000000e+00> : vector<16x32xf32>
    %7 = tpu.matmul %1, %6, %cst {dimension_numbers = #tpu.dot_dimension_numbers<[1], [0], [0], [1], [0, 0, 1, 1], [], []>} : vector<16x32xbf16>, vector<32x32xbf16>, vector<16x32xf32> -> vector<16x32xf32>
    %c0_10 = arith.constant 0 : index
    %c0_11 = arith.constant 0 : index
    %8 = vector.load %arg8[%c0_10, %c0_11] : memref<1x32xf32, #tpu.memory_space<vmem>>, vector<1x32xf32>
    %9 = vector.broadcast %8 : vector<1x32xf32> to vector<16x32xf32>
    %10 = arith.addf %7, %9 : vector<16x32xf32>
    %11 = arith.truncf %10 : vector<16x32xf32> to vector<16x32xbf16>
    %c0_12 = arith.constant 0 : index
    %c0_13 = arith.constant 0 : index
    %12 = vector.load %arg5[%c0_12, %c0_13] : memref<32x32xbf16, #tpu.memory_space<vmem>>, vector<32x32xbf16>
    %cst_14 = arith.constant dense<0.000000e+00> : vector<16x32xf32>
    %13 = tpu.matmul %3, %12, %cst_14 {dimension_numbers = #tpu.dot_dimension_numbers<[1], [0], [0], [1], [0, 0, 1, 1], [], []>} : vector<16x32xbf16>, vector<32x32xbf16>, vector<16x32xf32> -> vector<16x32xf32>
    %c0_15 = arith.constant 0 : index
    %c0_16 = arith.constant 0 : index
    %14 = vector.load %arg9[%c0_15, %c0_16] : memref<1x32xf32, #tpu.memory_space<vmem>>, vector<1x32xf32>
    %15 = vector.broadcast %14 : vector<1x32xf32> to vector<16x32xf32>
    %16 = arith.addf %13, %15 : vector<16x32xf32>
    %17 = arith.truncf %16 : vector<16x32xf32> to vector<16x32xbf16>
    %c0_17 = arith.constant 0 : index
    %c0_18 = arith.constant 0 : index
    %18 = vector.load %arg6[%c0_17, %c0_18] : memref<32x32xbf16, #tpu.memory_space<vmem>>, vector<32x32xbf16>
    %cst_19 = arith.constant dense<0.000000e+00> : vector<16x32xf32>
    %19 = tpu.matmul %5, %18, %cst_19 {dimension_numbers = #tpu.dot_dimension_numbers<[1], [0], [0], [1], [0, 0, 1, 1], [], []>} : vector<16x32xbf16>, vector<32x32xbf16>, vector<16x32xf32> -> vector<16x32xf32>
    %c0_20 = arith.constant 0 : index
    %c0_21 = arith.constant 0 : index
    %20 = vector.load %arg10[%c0_20, %c0_21] : memref<1x32xf32, #tpu.memory_space<vmem>>, vector<1x32xf32>
    %21 = vector.broadcast %20 : vector<1x32xf32> to vector<16x32xf32>
    %22 = arith.addf %19, %21 : vector<16x32xf32>
    %23 = arith.truncf %22 : vector<16x32xf32> to vector<16x32xbf16>
    %24 = vector.extract_strided_slice %11 {offsets = [0, 0], sizes = [16, 8], strides = [1, 1]} : vector<16x32xbf16> to vector<16x8xbf16>
    %25 = vector.shape_cast %24 : vector<16x8xbf16> to vector<2x8x8xbf16>
    %26 = vector.extract_strided_slice %17 {offsets = [0, 0], sizes = [16, 8], strides = [1, 1]} : vector<16x32xbf16> to vector<16x8xbf16>
    %27 = vector.shape_cast %26 : vector<16x8xbf16> to vector<2x8x8xbf16>
    %28 = vector.extract_strided_slice %23 {offsets = [0, 0], sizes = [16, 8], strides = [1, 1]} : vector<16x32xbf16> to vector<16x8xbf16>
    %29 = vector.shape_cast %28 : vector<16x8xbf16> to vector<2x8x8xbf16>
    "tpu.trace_start"() <{level = 10 : i32, message = "bqd,bkd->bqk"}> : () -> ()
    %cst_22 = arith.constant dense<0.000000e+00> : vector<2x8x8xf32>
    %30 = tpu.matmul %25, %27, %cst_22 {dimension_numbers = #tpu.dot_dimension_numbers<[2], [2], [1], [1], [0, 0, 0, 1, 1, 1], [0], [0]>} : vector<2x8x8xbf16>, vector<2x8x8xbf16>, vector<2x8x8xf32> -> vector<2x8x8xf32>
    "tpu.trace_stop"() : () -> ()
    %cst_23 = arith.constant dense<0xFF800000> : vector<2x8xf32>
    %31 = vector.multi_reduction <maximumf>, %30, %cst_23 [2] : vector<2x8x8xf32> to vector<2x8xf32>
    %32 = vector.shape_cast %31 : vector<2x8xf32> to vector<2x8x1xf32>
    %33 = vector.broadcast %32 : vector<2x8x1xf32> to vector<2x8x8xf32>
    %34 = arith.subf %30, %33 : vector<2x8x8xf32>
    %35 = math.exp %34 : vector<2x8x8xf32>
    %cst_24 = arith.constant dense<0.000000e+00> : vector<2x8xf32>
    %36 = vector.multi_reduction <add>, %35, %cst_24 [2] : vector<2x8x8xf32> to vector<2x8xf32>
    %37 = vector.shape_cast %36 : vector<2x8xf32> to vector<2x8x1xf32>
    %38 = tpu.reciprocal %37 {approx = true} : vector<2x8x1xf32> -> vector<2x8x1xf32>
    %39 = vector.broadcast %38 : vector<2x8x1xf32> to vector<2x8x8xf32>
    %40 = arith.mulf %35, %39 : vector<2x8x8xf32>
    %41 = arith.truncf %40 : vector<2x8x8xf32> to vector<2x8x8xbf16>
    "tpu.trace_start"() <{level = 10 : i32, message = "bqk,bkd->bqd"}> : () -> ()
    %cst_25 = arith.constant dense<0.000000e+00> : vector<2x8x8xf32>
    %42 = tpu.matmul %41, %29, %cst_25 {dimension_numbers = #tpu.dot_dimension_numbers<[2], [1], [1], [2], [0, 0, 0, 1, 1, 2], [0], [0]>} : vector<2x8x8xbf16>, vector<2x8x8xbf16>, vector<2x8x8xf32> -> vector<2x8x8xf32>
    "tpu.trace_stop"() : () -> ()
    %43 = vector.shape_cast %42 : vector<2x8x8xf32> to vector<16x8xf32>
    %44 = arith.truncf %43 : vector<16x8xf32> to vector<16x8xbf16>
    %45 = vector.extract_strided_slice %11 {offsets = [0, 8], sizes = [16, 8], strides = [1, 1]} : vector<16x32xbf16> to vector<16x8xbf16>
    %46 = vector.shape_cast %45 : vector<16x8xbf16> to vector<2x8x8xbf16>
    %47 = vector.extract_strided_slice %17 {offsets = [0, 8], sizes = [16, 8], strides = [1, 1]} : vector<16x32xbf16> to vector<16x8xbf16>
    %48 = vector.shape_cast %47 : vector<16x8xbf16> to vector<2x8x8xbf16>
    %49 = vector.extract_strided_slice %23 {offsets = [0, 8], sizes = [16, 8], strides = [1, 1]} : vector<16x32xbf16> to vector<16x8xbf16>
    %50 = vector.shape_cast %49 : vector<16x8xbf16> to vector<2x8x8xbf16>
    "tpu.trace_start"() <{level = 10 : i32, message = "bqd,bkd->bqk"}> : () -> ()
    %cst_26 = arith.constant dense<0.000000e+00> : vector<2x8x8xf32>
    %51 = tpu.matmul %46, %48, %cst_26 {dimension_numbers = #tpu.dot_dimension_numbers<[2], [2], [1], [1], [0, 0, 0, 1, 1, 1], [0], [0]>} : vector<2x8x8xbf16>, vector<2x8x8xbf16>, vector<2x8x8xf32> -> vector<2x8x8xf32>
    "tpu.trace_stop"() : () -> ()
    %cst_27 = arith.constant dense<0xFF800000> : vector<2x8xf32>
    %52 = vector.multi_reduction <maximumf>, %51, %cst_27 [2] : vector<2x8x8xf32> to vector<2x8xf32>
    %53 = vector.shape_cast %52 : vector<2x8xf32> to vector<2x8x1xf32>
    %54 = vector.broadcast %53 : vector<2x8x1xf32> to vector<2x8x8xf32>
    %55 = arith.subf %51, %54 : vector<2x8x8xf32>
    %56 = math.exp %55 : vector<2x8x8xf32>
    %cst_28 = arith.constant dense<0.000000e+00> : vector<2x8xf32>
    %57 = vector.multi_reduction <add>, %56, %cst_28 [2] : vector<2x8x8xf32> to vector<2x8xf32>
    %58 = vector.shape_cast %57 : vector<2x8xf32> to vector<2x8x1xf32>
    %59 = tpu.reciprocal %58 {approx = true} : vector<2x8x1xf32> -> vector<2x8x1xf32>
    %60 = vector.broadcast %59 : vector<2x8x1xf32> to vector<2x8x8xf32>
    %61 = arith.mulf %56, %60 : vector<2x8x8xf32>
    %62 = arith.truncf %61 : vector<2x8x8xf32> to vector<2x8x8xbf16>
    "tpu.trace_start"() <{level = 10 : i32, message = "bqk,bkd->bqd"}> : () -> ()
    %cst_29 = arith.constant dense<0.000000e+00> : vector<2x8x8xf32>
    %63 = tpu.matmul %62, %50, %cst_29 {dimension_numbers = #tpu.dot_dimension_numbers<[2], [1], [1], [2], [0, 0, 0, 1, 1, 2], [0], [0]>} : vector<2x8x8xbf16>, vector<2x8x8xbf16>, vector<2x8x8xf32> -> vector<2x8x8xf32>
    "tpu.trace_stop"() : () -> ()
    %64 = vector.shape_cast %63 : vector<2x8x8xf32> to vector<16x8xf32>
    %65 = arith.truncf %64 : vector<16x8xf32> to vector<16x8xbf16>
    %66 = vector.extract_strided_slice %11 {offsets = [0, 16], sizes = [16, 8], strides = [1, 1]} : vector<16x32xbf16> to vector<16x8xbf16>
    %67 = vector.shape_cast %66 : vector<16x8xbf16> to vector<2x8x8xbf16>
    %68 = vector.extract_strided_slice %17 {offsets = [0, 16], sizes = [16, 8], strides = [1, 1]} : vector<16x32xbf16> to vector<16x8xbf16>
    %69 = vector.shape_cast %68 : vector<16x8xbf16> to vector<2x8x8xbf16>
    %70 = vector.extract_strided_slice %23 {offsets = [0, 16], sizes = [16, 8], strides = [1, 1]} : vector<16x32xbf16> to vector<16x8xbf16>
    %71 = vector.shape_cast %70 : vector<16x8xbf16> to vector<2x8x8xbf16>
    "tpu.trace_start"() <{level = 10 : i32, message = "bqd,bkd->bqk"}> : () -> ()
    %cst_30 = arith.constant dense<0.000000e+00> : vector<2x8x8xf32>
    %72 = tpu.matmul %67, %69, %cst_30 {dimension_numbers = #tpu.dot_dimension_numbers<[2], [2], [1], [1], [0, 0, 0, 1, 1, 1], [0], [0]>} : vector<2x8x8xbf16>, vector<2x8x8xbf16>, vector<2x8x8xf32> -> vector<2x8x8xf32>
    "tpu.trace_stop"() : () -> ()
    %cst_31 = arith.constant dense<0xFF800000> : vector<2x8xf32>
    %73 = vector.multi_reduction <maximumf>, %72, %cst_31 [2] : vector<2x8x8xf32> to vector<2x8xf32>
    %74 = vector.shape_cast %73 : vector<2x8xf32> to vector<2x8x1xf32>
    %75 = vector.broadcast %74 : vector<2x8x1xf32> to vector<2x8x8xf32>
    %76 = arith.subf %72, %75 : vector<2x8x8xf32>
    %77 = math.exp %76 : vector<2x8x8xf32>
    %cst_32 = arith.constant dense<0.000000e+00> : vector<2x8xf32>
    %78 = vector.multi_reduction <add>, %77, %cst_32 [2] : vector<2x8x8xf32> to vector<2x8xf32>
    %79 = vector.shape_cast %78 : vector<2x8xf32> to vector<2x8x1xf32>
    %80 = tpu.reciprocal %79 {approx = true} : vector<2x8x1xf32> -> vector<2x8x1xf32>
    %81 = vector.broadcast %80 : vector<2x8x1xf32> to vector<2x8x8xf32>
    %82 = arith.mulf %77, %81 : vector<2x8x8xf32>
    %83 = arith.truncf %82 : vector<2x8x8xf32> to vector<2x8x8xbf16>
    "tpu.trace_start"() <{level = 10 : i32, message = "bqk,bkd->bqd"}> : () -> ()
    %cst_33 = arith.constant dense<0.000000e+00> : vector<2x8x8xf32>
    %84 = tpu.matmul %83, %71, %cst_33 {dimension_numbers = #tpu.dot_dimension_numbers<[2], [1], [1], [2], [0, 0, 0, 1, 1, 2], [0], [0]>} : vector<2x8x8xbf16>, vector<2x8x8xbf16>, vector<2x8x8xf32> -> vector<2x8x8xf32>
    "tpu.trace_stop"() : () -> ()
    %85 = vector.shape_cast %84 : vector<2x8x8xf32> to vector<16x8xf32>
    %86 = arith.truncf %85 : vector<16x8xf32> to vector<16x8xbf16>
    %87 = vector.extract_strided_slice %11 {offsets = [0, 24], sizes = [16, 8], strides = [1, 1]} : vector<16x32xbf16> to vector<16x8xbf16>
    %88 = vector.shape_cast %87 : vector<16x8xbf16> to vector<2x8x8xbf16>
    %89 = vector.extract_strided_slice %17 {offsets = [0, 24], sizes = [16, 8], strides = [1, 1]} : vector<16x32xbf16> to vector<16x8xbf16>
    %90 = vector.shape_cast %89 : vector<16x8xbf16> to vector<2x8x8xbf16>
    %91 = vector.extract_strided_slice %23 {offsets = [0, 24], sizes = [16, 8], strides = [1, 1]} : vector<16x32xbf16> to vector<16x8xbf16>
    %92 = vector.shape_cast %91 : vector<16x8xbf16> to vector<2x8x8xbf16>
    "tpu.trace_start"() <{level = 10 : i32, message = "bqd,bkd->bqk"}> : () -> ()
    %cst_34 = arith.constant dense<0.000000e+00> : vector<2x8x8xf32>
    %93 = tpu.matmul %88, %90, %cst_34 {dimension_numbers = #tpu.dot_dimension_numbers<[2], [2], [1], [1], [0, 0, 0, 1, 1, 1], [0], [0]>} : vector<2x8x8xbf16>, vector<2x8x8xbf16>, vector<2x8x8xf32> -> vector<2x8x8xf32>
    "tpu.trace_stop"() : () -> ()
    %cst_35 = arith.constant dense<0xFF800000> : vector<2x8xf32>
    %94 = vector.multi_reduction <maximumf>, %93, %cst_35 [2] : vector<2x8x8xf32> to vector<2x8xf32>
    %95 = vector.shape_cast %94 : vector<2x8xf32> to vector<2x8x1xf32>
    %96 = vector.broadcast %95 : vector<2x8x1xf32> to vector<2x8x8xf32>
    %97 = arith.subf %93, %96 : vector<2x8x8xf32>
    %98 = math.exp %97 : vector<2x8x8xf32>
    %cst_36 = arith.constant dense<0.000000e+00> : vector<2x8xf32>
    %99 = vector.multi_reduction <add>, %98, %cst_36 [2] : vector<2x8x8xf32> to vector<2x8xf32>
    %100 = vector.shape_cast %99 : vector<2x8xf32> to vector<2x8x1xf32>
    %101 = tpu.reciprocal %100 {approx = true} : vector<2x8x1xf32> -> vector<2x8x1xf32>
    %102 = vector.broadcast %101 : vector<2x8x1xf32> to vector<2x8x8xf32>
    %103 = arith.mulf %98, %102 : vector<2x8x8xf32>
    %104 = arith.truncf %103 : vector<2x8x8xf32> to vector<2x8x8xbf16>
    "tpu.trace_start"() <{level = 10 : i32, message = "bqk,bkd->bqd"}> : () -> ()
    %cst_37 = arith.constant dense<0.000000e+00> : vector<2x8x8xf32>
    %105 = tpu.matmul %104, %92, %cst_37 {dimension_numbers = #tpu.dot_dimension_numbers<[2], [1], [1], [2], [0, 0, 0, 1, 1, 2], [0], [0]>} : vector<2x8x8xbf16>, vector<2x8x8xbf16>, vector<2x8x8xf32> -> vector<2x8x8xf32>
    "tpu.trace_stop"() : () -> ()
    %106 = vector.shape_cast %105 : vector<2x8x8xf32> to vector<16x8xf32>
    %107 = arith.truncf %106 : vector<16x8xf32> to vector<16x8xbf16>
    %108 = tpu.concatenate %44, %65, %86, %107 in 1 : vector<16x8xbf16>, vector<16x8xbf16>, vector<16x8xbf16>, vector<16x8xbf16> -> vector<16x32xbf16>
    %c0_38 = arith.constant 0 : index
    %c0_39 = arith.constant 0 : index
    %109 = vector.load %arg7[%c0_38, %c0_39] : memref<32x32xbf16, #tpu.memory_space<vmem>>, vector<32x32xbf16>
    %cst_40 = arith.constant dense<0.000000e+00> : vector<16x32xf32>
    %110 = tpu.matmul %108, %109, %cst_40 {dimension_numbers = #tpu.dot_dimension_numbers<[1], [0], [0], [1], [0, 0, 1, 1], [], []>} : vector<16x32xbf16>, vector<32x32xbf16>, vector<16x32xf32> -> vector<16x32xf32>
    %c0_41 = arith.constant 0 : index
    %c0_42 = arith.constant 0 : index
    %111 = vector.load %arg11[%c0_41, %c0_42] : memref<1x32xf32, #tpu.memory_space<vmem>>, vector<1x32xf32>
    %112 = vector.broadcast %111 : vector<1x32xf32> to vector<16x32xf32>
    %113 = arith.addf %110, %112 : vector<16x32xf32>
    %114 = vector.shape_cast %113 : vector<16x32xf32> to vector<2x8x32xf32>
    %115 = arith.truncf %114 : vector<2x8x32xf32> to vector<2x8x32xbf16>
    %c0_43 = arith.constant 0 : index
    %c0_44 = arith.constant 0 : index
    %c0_45 = arith.constant 0 : index
    %116 = vector.load %arg12[%c0_43, %c0_44, %c0_45] : memref<2x8x32xbf16, #tpu.memory_space<vmem>>, vector<2x8x32xbf16>
    tpu.vector_store %arg12[%c0_43, %c0_44, %c0_45], %115 {strides = array<i32>} : memref<2x8x32xbf16, #tpu.memory_space<vmem>>, vector<2x8x32xbf16>,
    return
  }
  func.func @transform_0(%arg0: i32) -> (i32, i32, i32) {
    %c0_i32 = arith.constant 0 : i32
    %c0_i32_0 = arith.constant 0 : i32
    %c0_i32_1 = arith.constant 0 : i32
    return %arg0, %c0_i32, %c0_i32_0 : i32, i32, i32
  }
  func.func @transform_1(%arg0: i32) -> (i32, i32, i32) {
    %c0_i32 = arith.constant 0 : i32
    %c0_i32_0 = arith.constant 0 : i32
    %c0_i32_1 = arith.constant 0 : i32
    return %arg0, %c0_i32, %c0_i32_0 : i32, i32, i32
  }
  func.func @transform_2(%arg0: i32) -> (i32, i32, i32) {
    %c0_i32 = arith.constant 0 : i32
    %c0_i32_0 = arith.constant 0 : i32
    %c0_i32_1 = arith.constant 0 : i32
    return %arg0, %c0_i32, %c0_i32_0 : i32, i32, i32
  }
  func.func @transform_3(%arg0: i32) -> (i32, i32) {
    %c0_i32 = arith.constant 0 : i32
    %c0_i32_0 = arith.constant 0 : i32
    %c0_i32_1 = arith.constant 0 : i32
    return %c0_i32, %c0_i32_0 : i32, i32
  }
  func.func @transform_4(%arg0: i32) -> (i32, i32) {
    %c0_i32 = arith.constant 0 : i32
    %c0_i32_0 = arith.constant 0 : i32
    %c0_i32_1 = arith.constant 0 : i32
    return %c0_i32, %c0_i32_0 : i32, i32
  }
  func.func @transform_5(%arg0: i32) -> (i32, i32) {
    %c0_i32 = arith.constant 0 : i32
    %c0_i32_0 = arith.constant 0 : i32
    %c0_i32_1 = arith.constant 0 : i32
    return %c0_i32, %c0_i32_0 : i32, i32
  }
  func.func @transform_6(%arg0: i32) -> (i32, i32) {
    %c0_i32 = arith.constant 0 : i32
    %c0_i32_0 = arith.constant 0 : i32
    %c0_i32_1 = arith.constant 0 : i32
    return %c0_i32, %c0_i32_0 : i32, i32
  }
  func.func @transform_7(%arg0: i32) -> (i32, i32) {
    %c0_i32 = arith.constant 0 : i32
    %c0_i32_0 = arith.constant 0 : i32
    %c0_i32_1 = arith.constant 0 : i32
    return %c0_i32, %c0_i32_0 : i32, i32
  }
  func.func @transform_8(%arg0: i32) -> (i32, i32) {
    %c0_i32 = arith.constant 0 : i32
    %c0_i32_0 = arith.constant 0 : i32
    %c0_i32_1 = arith.constant 0 : i32
    return %c0_i32, %c0_i32_0 : i32, i32
  }
  func.func @transform_9(%arg0: i32) -> (i32, i32) {
    %c0_i32 = arith.constant 0 : i32
    %c0_i32_0 = arith.constant 0 : i32
    %c0_i32_1 = arith.constant 0 : i32
    return %c0_i32, %c0_i32_0 : i32, i32
  }
  func.func @transform_10(%arg0: i32) -> (i32, i32) {
    %c0_i32 = arith.constant 0 : i32
    %c0_i32_0 = arith.constant 0 : i32
    %c0_i32_1 = arith.constant 0 : i32
    return %c0_i32, %c0_i32_0 : i32, i32
  }
  func.func @transform_11(%arg0: i32) -> (i32, i32, i32) {
    %c0_i32 = arith.constant 0 : i32
    %c0_i32_0 = arith.constant 0 : i32
    %c0_i32_1 = arith.constant 0 : i32
    return %arg0, %c0_i32, %c0_i32_0 : i32, i32, i32
  }
}

</mosaic_0001>

<llo_original>
// kernel: tpu_custom_call.1
$region0: #{tpu_custom_call.1}
  #allocation0 [shape = 'u32[]', space=smem, size = 0x4, offset = 0x4, fixed_abs, tag = 'smem constant byte address 0x4 - core index']
  #allocation1 [shape = 'u32[144,128]{1,0:T(1,128)}', space=vmem, size = 0x12000, scoped, tag = 'internal scratch']
  %s0 = inlined_call_operand.hbm [shape: bf16[2,8,32], index: 0, kind: input, shape index: {}]
  %s1 = inlined_call_operand.hbm [shape: bf16[2,8,32], index: 1, kind: input, shape index: {}]
  %s2 = inlined_call_operand.hbm [shape: bf16[2,8,32], index: 2, kind: input, shape index: {}]
  %s3 = inlined_call_operand.hbm [shape: bf16[32,32], index: 3, kind: input, shape index: {}]
  %s4 = inlined_call_operand.hbm [shape: bf16[32,32], index: 4, kind: input, shape index: {}]
  %s5 = inlined_call_operand.hbm [shape: bf16[32,32], index: 5, kind: input, shape index: {}]
  %s6 = inlined_call_operand.hbm [shape: bf16[32,32], index: 6, kind: input, shape index: {}]
  %s7 = inlined_call_operand.hbm [shape: f32[1,32], index: 7, kind: input, shape index: {}]
  %s8 = inlined_call_operand.hbm [shape: f32[1,32], index: 8, kind: input, shape index: {}]
  %s9 = inlined_call_operand.hbm [shape: f32[1,32], index: 9, kind: input, shape index: {}]
  %s10 = inlined_call_operand.hbm [shape: f32[1,32], index: 10, kind: input, shape index: {}]
  %s11 = inlined_call_operand.hbm [shape: bf16[2,8,32], index: 11, kind: output, shape index: {}]
  %s12 = sld [smem:[#allocation0]]
  $region98: #{tpu_custom_call.1} parent=0
    _
  %s14 = ssub.s32 1, %s12
  %s15 = scalar_select 0, %s14, %s12
  $region1: #{tpu_custom_call.1} parent=0
    #allocation2 [shape = 'u8[4096]{0}', space=vmem, size = 0x1000, scoped, tag = 'input window, operand 0, single buffered']
    #allocation3 [shape = 's32[1]{0}', space=sflag, size = 0x4, scoped, tag = 'scoped memory for tpu_custom_call.1']
    #allocation4 [shape = 's32[1]{0}', space=sflag, size = 0x4, scoped, tag = 'scoped memory for tpu_custom_call.1']
    #allocation5 [shape = 'u8[4096]{0}', space=vmem, size = 0x1000, scoped, tag = 'input window, operand 1, single buffered']
    #allocation6 [shape = 's32[1]{0}', space=sflag, size = 0x4, scoped, tag = 'scoped memory for tpu_custom_call.1']
    #allocation7 [shape = 'u8[4096]{0}', space=vmem, size = 0x1000, scoped, tag = 'input window, operand 2, single buffered']
    #allocation8 [shape = 'u8[8192]{0}', space=vmem, size = 0x2000, scoped, tag = 'input window, operand 3, single buffered']
    #allocation9 [shape = 's32[1]{0}', space=sflag, size = 0x4, scoped, tag = 'scoped memory for tpu_custom_call.1']
    #allocation10 [shape = 'u8[8192]{0}', space=vmem, size = 0x2000, scoped, tag = 'input window, operand 4, single buffered']
    #allocation11 [shape = 'u8[8192]{0}', space=vmem, size = 0x2000, scoped, tag = 'input window, operand 5, single buffered']
    #allocation12 [shape = 's32[1]{0}', space=sflag, size = 0x4, scoped, tag = 'scoped memory for tpu_custom_call.1']
    #allocation13 [shape = 'u8[8192]{0}', space=vmem, size = 0x2000, scoped, tag = 'input window, operand 6, single buffered']
    #allocation14 [shape = 'u8[512]{0}', space=vmem, size = 0x400, scoped, tag = 'input window, operand 7, single buffered']
    #allocation15 [shape = 's32[1]{0}', space=sflag, size = 0x4, scoped, tag = 'scoped memory for tpu_custom_call.1']
    #allocation16 [shape = 'u8[512]{0}', space=vmem, size = 0x400, scoped, tag = 'input window, operand 8, single buffered']
    #allocation17 [shape = 'u8[512]{0}', space=vmem, size = 0x400, scoped, tag = 'input window, operand 9, single buffered']
    #allocation18 [shape = 's32[1]{0}', space=sflag, size = 0x4, scoped, tag = 'scoped memory for tpu_custom_call.1']
    #allocation19 [shape = 'u8[512]{0}', space=vmem, size = 0x400, scoped, tag = 'input window, operand 10, single buffered']
    #allocation20 [shape = 'u8[4096]{0}', space=vmem, size = 0x1000, scoped, tag = 'output window, operand 0, single buffered']
    %16 = vsyncpa [#allocation3], 0
    %17 = vsyncpa [#allocation6], 0
    %18 = vsyncpa [#allocation9], 0
    %19 = vsyncpa [#allocation12], 0
    %20 = vsyncpa [#allocation15], 0
    %21 = vsyncpa [#allocation18], 0
    %22 = vsyncpa [#allocation4], 0
    // Predicated region
    $region2: #{tpu_custom_call.1} parent=1 // pred_check
      _
    $region3: #{tpu_custom_call.1} parent=1 // pred_check_branch
      %24 = sbr.rel (0) target = $region5
    $region4: #{tpu_custom_call.1} parent=1 // pred_region
      %s26 = ssub.s32 128, 128
      %27 = vsyncadd [#allocation3], %s26
      %s28 = sshll.u32 [#allocation2], 4
      %s29 = int_to_ptr.vmem [resolvable:$true] %s28
      %34 = dma.hbm_to_vmem [thread:$0]  %s0, 128, %s29, [#allocation3], 64, 64, 4
    $region5: #{tpu_custom_call.1} parent=1 // pred_fallthru
      _
    // Predicated region
    $region6: #{tpu_custom_call.1} parent=1 // pred_check
      _
    $region7: #{tpu_custom_call.1} parent=1 // pred_check_branch
      %36 = sbr.rel (0) target = $region9
    $region8: #{tpu_custom_call.1} parent=1 // pred_region
      %s38 = ssub.s32 128, 128
      %39 = vsyncadd [#allocation6], %s38
      %s40 = sshll.u32 [#allocation5], 4
      %s41 = int_to_ptr.vmem [resolvable:$true] %s40
      %46 = dma.hbm_to_vmem [thread:$0]  %s1, 128, %s41, [#allocation6], 64, 64, 4
    $region9: #{tpu_custom_call.1} parent=1 // pred_fallthru
      _
    // Predicated region
    $region10: #{tpu_custom_call.1} parent=1 // pred_check
      _
    $region11: #{tpu_custom_call.1} parent=1 // pred_check_branch
      %48 = sbr.rel (0) target = $region13
    $region12: #{tpu_custom_call.1} parent=1 // pred_region
      %s50 = ssub.s32 128, 128
      %51 = vsyncadd [#allocation6], %s50
      %s52 = sshll.u32 [#allocation7], 4
      %s53 = int_to_ptr.vmem [resolvable:$true] %s52
      %58 = dma.hbm_to_vmem [thread:$0]  %s2, 128, %s53, [#allocation6], 64, 64, 4
    $region13: #{tpu_custom_call.1} parent=1 // pred_fallthru
      _
    // Predicated region
    $region14: #{tpu_custom_call.1} parent=1 // pred_check
      _
    $region15: #{tpu_custom_call.1} parent=1 // pred_check_branch
      %60 = sbr.rel (0) target = $region17
    $region16: #{tpu_custom_call.1} parent=1 // pred_region
      %s62 = ssub.s32 256, 256
      %63 = vsyncadd [#allocation9], %s62
      %s64 = sshll.u32 [#allocation8], 4
      %s65 = int_to_ptr.vmem [resolvable:$true] %s64
      %70 = dma.hbm_to_vmem [thread:$0]  %s3, 256, %s65, [#allocation9], 64, 64, 4
    $region17: #{tpu_custom_call.1} parent=1 // pred_fallthru
      _
    // Predicated region
    $region18: #{tpu_custom_call.1} parent=1 // pred_check
      _
    $region19: #{tpu_custom_call.1} parent=1 // pred_check_branch
      %72 = sbr.rel (0) target = $region21
    $region20: #{tpu_custom_call.1} parent=1 // pred_region
      %s74 = ssub.s32 256, 256
      %75 = vsyncadd [#allocation9], %s74
      %s76 = sshll.u32 [#allocation10], 4
      %s77 = int_to_ptr.vmem [resolvable:$true] %s76
      %82 = dma.hbm_to_vmem [thread:$0]  %s4, 256, %s77, [#allocation9], 64, 64, 4
    $region21: #{tpu_custom_call.1} parent=1 // pred_fallthru
      _
    // Predicated region
    $region22: #{tpu_custom_call.1} parent=1 // pred_check
      _
    $region23: #{tpu_custom_call.1} parent=1 // pred_check_branch
      %84 = sbr.rel (0) target = $region25
    $region24: #{tpu_custom_call.1} parent=1 // pred_region
      %s86 = ssub.s32 256, 256
      %87 = vsyncadd [#allocation12], %s86
      %s88 = sshll.u32 [#allocation11], 4
      %s89 = int_to_ptr.vmem [resolvable:$true] %s88
      %94 = dma.hbm_to_vmem [thread:$0]  %s5, 256, %s89, [#allocation12], 64, 64, 4
    $region25: #{tpu_custom_call.1} parent=1 // pred_fallthru
      _
    // Predicated region
    $region26: #{tpu_custom_call.1} parent=1 // pred_check
      _
    $region27: #{tpu_custom_call.1} parent=1 // pred_check_branch
      %96 = sbr.rel (0) target = $region29
    $region28: #{tpu_custom_call.1} parent=1 // pred_region
      %s98 = ssub.s32 256, 256
      %99 = vsyncadd [#allocation12], %s98
      %s100 = sshll.u32 [#allocation13], 4
      %s101 = int_to_ptr.vmem [resolvable:$true] %s100
      %106 = dma.hbm_to_vmem [thread:$0]  %s6, 256, %s101, [#allocation12], 64, 64, 4
    $region29: #{tpu_custom_call.1} parent=1 // pred_fallthru
      _
    // Predicated region
    $region30: #{tpu_custom_call.1} parent=1 // pred_check
      _
    $region31: #{tpu_custom_call.1} parent=1 // pred_check_branch
      %108 = sbr.rel (0) target = $region33
    $region32: #{tpu_custom_call.1} parent=1 // pred_region
      %s110 = ssub.s32 16, 16
      %111 = vsyncadd [#allocation15], %s110
      %s113 = sshll.u32 [#allocation14], 4
      %s114 = int_to_ptr.vmem [resolvable:$true] %s113
      %116 = dma.hbm_to_vmem [thread:$0]  %s7, 16, %s114, [#allocation15]
    $region33: #{tpu_custom_call.1} parent=1 // pred_fallthru
      _
    // Predicated region
    $region34: #{tpu_custom_call.1} parent=1 // pred_check
      _
    $region35: #{tpu_custom_call.1} parent=1 // pred_check_branch
      %118 = sbr.rel (0) target = $region37
    $region36: #{tpu_custom_call.1} parent=1 // pred_region
      %s120 = ssub.s32 16, 16
      %121 = vsyncadd [#allocation15], %s120
      %s123 = sshll.u32 [#allocation16], 4
      %s124 = int_to_ptr.vmem [resolvable:$true] %s123
      %126 = dma.hbm_to_vmem [thread:$0]  %s8, 16, %s124, [#allocation15]
    $region37: #{tpu_custom_call.1} parent=1 // pred_fallthru
      _
    // Predicated region
    $region38: #{tpu_custom_call.1} parent=1 // pred_check
      _
    $region39: #{tpu_custom_call.1} parent=1 // pred_check_branch
      %128 = sbr.rel (0) target = $region41
    $region40: #{tpu_custom_call.1} parent=1 // pred_region
      %s130 = ssub.s32 16, 16
      %131 = vsyncadd [#allocation18], %s130
      %s133 = sshll.u32 [#allocation17], 4
      %s134 = int_to_ptr.vmem [resolvable:$true] %s133
      %136 = dma.hbm_to_vmem [thread:$0]  %s9, 16, %s134, [#allocation18]
    $region41: #{tpu_custom_call.1} parent=1 // pred_fallthru
      _
    // Predicated region
    $region42: #{tpu_custom_call.1} parent=1 // pred_check
      _
    $region43: #{tpu_custom_call.1} parent=1 // pred_check_branch
      %138 = sbr.rel (0) target = $region45
    $region44: #{tpu_custom_call.1} parent=1 // pred_region
      %s140 = ssub.s32 16, 16
      %141 = vsyncadd [#allocation18], %s140
      %s143 = sshll.u32 [#allocation19], 4
      %s144 = int_to_ptr.vmem [resolvable:$true] %s143
      %146 = dma.hbm_to_vmem [thread:$0]  %s10, 16, %s144, [#allocation18]
    $region45: #{tpu_custom_call.1} parent=1 // pred_fallthru
      _
    // Predicated region
    $region46: #{tpu_custom_call.1} parent=1 // pred_check
      _
    $region47: #{tpu_custom_call.1} parent=1 // pred_check_branch
      %148 = sbr.rel (0) target = $region49
    $region48: #{tpu_custom_call.1} parent=1 // pred_region
      %149 = dma.done [#allocation3], 128
    $region49: #{tpu_custom_call.1} parent=1 // pred_fallthru
      _
    // Predicated region
    $region50: #{tpu_custom_call.1} parent=1 // pred_check
      _
    $region51: #{tpu_custom_call.1} parent=1 // pred_check_branch
      %151 = sbr.rel (0) target = $region53
    $region52: #{tpu_custom_call.1} parent=1 // pred_region
      %152 = dma.done [#allocation6], 128
    $region53: #{tpu_custom_call.1} parent=1 // pred_fallthru
      _
    // Predicated region
    $region54: #{tpu_custom_call.1} parent=1 // pred_check
      _
    $region55: #{tpu_custom_call.1} parent=1 // pred_check_branch
      %154 = sbr.rel (0) target = $region57
    $region56: #{tpu_custom_call.1} parent=1 // pred_region
      %155 = dma.done [#allocation6], 128
    $region57: #{tpu_custom_call.1} parent=1 // pred_fallthru
      _
    // Predicated region
    $region58: #{tpu_custom_call.1} parent=1 // pred_check
      _
    $region59: #{tpu_custom_call.1} parent=1 // pred_check_branch
      %157 = sbr.rel (0) target = $region61
    $region60: #{tpu_custom_call.1} parent=1 // pred_region
      %158 = dma.done [#allocation9], 256
    $region61: #{tpu_custom_call.1} parent=1 // pred_fallthru
      _
    // Predicated region
    $region62: #{tpu_custom_call.1} parent=1 // pred_check
      _
    $region63: #{tpu_custom_call.1} parent=1 // pred_check_branch
      %160 = sbr.rel (0) target = $region65
    $region64: #{tpu_custom_call.1} parent=1 // pred_region
      %161 = dma.done [#allocation9], 256
    $region65: #{tpu_custom_call.1} parent=1 // pred_fallthru
      _
    // Predicated region
    $region66: #{tpu_custom_call.1} parent=1 // pred_check
      _
    $region67: #{tpu_custom_call.1} parent=1 // pred_check_branch
      %163 = sbr.rel (0) target = $region69
    $region68: #{tpu_custom_call.1} parent=1 // pred_region
      %164 = dma.done [#allocation12], 256
    $region69: #{tpu_custom_call.1} parent=1 // pred_fallthru
      _
    // Predicated region
    $region70: #{tpu_custom_call.1} parent=1 // pred_check
      _
    $region71: #{tpu_custom_call.1} parent=1 // pred_check_branch
      %166 = sbr.rel (0) target = $region73
    $region72: #{tpu_custom_call.1} parent=1 // pred_region
      %167 = dma.done [#allocation12], 256
    $region73: #{tpu_custom_call.1} parent=1 // pred_fallthru
      _
    // Predicated region
    $region74: #{tpu_custom_call.1} parent=1 // pred_check
      _
    $region75: #{tpu_custom_call.1} parent=1 // pred_check_branch
      %169 = sbr.rel (0) target = $region77
    $region76: #{tpu_custom_call.1} parent=1 // pred_region
      %170 = dma.done [#allocation15], 16
    $region77: #{tpu_custom_call.1} parent=1 // pred_fallthru
      _
    // Predicated region
    $region78: #{tpu_custom_call.1} parent=1 // pred_check
      _
    $region79: #{tpu_custom_call.1} parent=1 // pred_check_branch
      %172 = sbr.rel (0) target = $region81
    $region80: #{tpu_custom_call.1} parent=1 // pred_region
      %173 = dma.done [#allocation15], 16
    $region81: #{tpu_custom_call.1} parent=1 // pred_fallthru
      _
    // Predicated region
    $region82: #{tpu_custom_call.1} parent=1 // pred_check
      _
    $region83: #{tpu_custom_call.1} parent=1 // pred_check_branch
      %175 = sbr.rel (0) target = $region85
    $region84: #{tpu_custom_call.1} parent=1 // pred_region
      %176 = dma.done [#allocation18], 16
    $region85: #{tpu_custom_call.1} parent=1 // pred_fallthru
      _
    // Predicated region
    $region86: #{tpu_custom_call.1} parent=1 // pred_check
      _
    $region87: #{tpu_custom_call.1} parent=1 // pred_check_branch
      %178 = sbr.rel (0) target = $region89
    $region88: #{tpu_custom_call.1} parent=1 // pred_region
      %179 = dma.done [#allocation18], 16
    $region89: #{tpu_custom_call.1} parent=1 // pred_fallthru
      _
    %v181 = vld [vmem:[#allocation2] sm:$0xf]
    %v182 = vld [vmem:[#allocation2 + $0x4] sm:$0xf]
    %v183 = vld [vmem:[#allocation5] sm:$0xf]
    %v184 = vld [vmem:[#allocation5 + $0x4] sm:$0xf]
    %v185 = vld [vmem:[#allocation7] sm:$0xf]
    %v186 = vld [vmem:[#allocation7 + $0x4] sm:$0xf]
    %v187 = vld [vmem:[#allocation8] sm:$0xf]
    %v188 = vld [vmem:[#allocation8 + $0x4] sm:$0xf]
    %v189 = vld [vmem:[#allocation8 + $0x8] sm:$0xf]
    %v190 = vld [vmem:[#allocation8 + $0xc] sm:$0xf]
    %v191 = vld [vmem:[#allocation14] sm:$0x1]
    %v193 = vlaneseq
    %v194 = vshrl.u32 %v193, 7
    %v195 = vsub.s32 0, %v194
    %v196 = vrot.slane %v191, %v195
    %v200 = vunpack.c.l.b16 %v181
    %v201 = vunpack.c.l.b16 %v182
    %v202 = vpack.c.b16 %v201, %v200
    %v207 = vunpack.c.l.b16 %v187
    %v208 = vunpack.c.l.b16 %v188
    %v209 = vunpack.c.l.b16 %v189
    %v210 = vunpack.c.l.b16 %v190
    %v211 = vpack.c.b16 %v208, %v207
    %v212 = vpack.c.b16 %v210, %v209
    %vm215 = vcmask 261120
    %v217 = vsel %vm215, %v202, 0
    %219 = vmatprep.subr.bf16.mxu0 0
    %220 = vmatpush1.bf16.msra.mxu0 %v211
    %221 = vmatprep.subr.bf16.mxu0 0
    %222 = vmatpush1.bf16.msra.mxu0 %v212
    %223 = vmatprep.subr.bf16.mxu0 0
    %224 = vmatpush1.bf16.msra.mxu0 0
    %225 = vmatprep.subr.bf16.mxu0 0
    %226 = vmatpush1.bf16.msra.mxu0 0
    %227 = vmatprep.subr.bf16.mxu0 0
    %228 = vmatpush1.bf16.msra.mxu0 0
    %229 = vmatprep.subr.bf16.mxu0 0
    %230 = vmatpush1.bf16.msra.mxu0 0
    %231 = vmatprep.subr.bf16.mxu0 0
    %232 = vmatpush1.bf16.msra.mxu0 0
    %233 = vmatprep.subr.bf16.mxu0 0
    %234 = vmatpush1.bf16.msra.mxu0 0
    %235 = vmatprep.subr.bf16.mxu0 0
    %236 = vmatpush1.bf16.msra.mxu0 0
    %237 = vmatprep.subr.bf16.mxu0 0
    %238 = vmatpush1.bf16.msra.mxu0 0
    %239 = vmatprep.subr.bf16.mxu0 0
    %240 = vmatpush1.bf16.msra.mxu0 0
    %241 = vmatprep.subr.bf16.mxu0 0
    %242 = vmatpush1.bf16.msra.mxu0 0
    %243 = vmatprep.subr.bf16.mxu0 0
    %244 = vmatpush1.bf16.msra.mxu0 0
    %245 = vmatprep.subr.bf16.mxu0 0
    %246 = vmatpush1.bf16.msra.mxu0 0
    %247 = vmatprep.subr.bf16.mxu0 0
    %248 = vmatpush1.bf16.msra.mxu0 0
    %249 = vmatprep.subr.bf16.mxu0 0
    %250 = vmatpush1.bf16.msra.mxu0 0
    %251 = vmatprep.mubr.bf16.mxu0 0
    %252 = vmatmul.mubr.bf16.gmra.mrb[0].mxu0 %v217
    %v253 = vpop.f32.mrb[0].mxu0
    %v254 = vadd.f32 %v196, %v253
    %v255 = vpop.f32.mrb[0].mxu0
    %v256 = vpop.f32.mrb[0].mxu0
    %v257 = vadd.f32 %v196, %v256
    %v258 = vpop.f32.mrb[0].mxu0
    %259 = vdwg.mxu0
    %v260 = vpack.c.bf16 %v257, %v254
    %v261 = vld [vmem:[#allocation10] sm:$0xf]
    %v262 = vld [vmem:[#allocation10 + $0x4] sm:$0xf]
    %v263 = vld [vmem:[#allocation10 + $0x8] sm:$0xf]
    %v264 = vld [vmem:[#allocation10 + $0xc] sm:$0xf]
    %v265 = vld [vmem:[#allocation16] sm:$0x1]
    %v267 = vlaneseq
    %v268 = vshrl.u32 %v267, 7
    %v269 = vsub.s32 0, %v268
    %v270 = vrot.slane %v265, %v269
    %v274 = vunpack.c.l.b16 %v183
    %v275 = vunpack.c.l.b16 %v184
    %v276 = vpack.c.b16 %v275, %v274
    %v281 = vunpack.c.l.b16 %v261
    %v282 = vunpack.c.l.b16 %v262
    %v283 = vunpack.c.l.b16 %v263
    %v284 = vunpack.c.l.b16 %v264
    %v285 = vpack.c.b16 %v282, %v281
    %v286 = vpack.c.b16 %v284, %v283
    %v290 = vsel %vm215, %v276, 0
    %292 = vmatprep.subr.bf16.mxu0 0
    %293 = vmatpush1.bf16.msra.mxu0 %v285
    %294 = vmatprep.subr.bf16.mxu0 0
    %295 = vmatpush1.bf16.msra.mxu0 %v286
    %296 = vmatprep.subr.bf16.mxu0 0
    %297 = vmatpush1.bf16.msra.mxu0 0
    %298 = vmatprep.subr.bf16.mxu0 0
    %299 = vmatpush1.bf16.msra.mxu0 0
    %300 = vmatprep.subr.bf16.mxu0 0
    %301 = vmatpush1.bf16.msra.mxu0 0
    %302 = vmatprep.subr.bf16.mxu0 0
    %303 = vmatpush1.bf16.msra.mxu0 0
    %304 = vmatprep.subr.bf16.mxu0 0
    %305 = vmatpush1.bf16.msra.mxu0 0
    %306 = vmatprep.subr.bf16.mxu0 0
    %307 = vmatpush1.bf16.msra.mxu0 0
    %308 = vmatprep.subr.bf16.mxu0 0
    %309 = vmatpush1.bf16.msra.mxu0 0
    %310 = vmatprep.subr.bf16.mxu0 0
    %311 = vmatpush1.bf16.msra.mxu0 0
    %312 = vmatprep.subr.bf16.mxu0 0
    %313 = vmatpush1.bf16.msra.mxu0 0
    %314 = vmatprep.subr.bf16.mxu0 0
    %315 = vmatpush1.bf16.msra.mxu0 0
    %316 = vmatprep.subr.bf16.mxu0 0
    %317 = vmatpush1.bf16.msra.mxu0 0
    %318 = vmatprep.subr.bf16.mxu0 0
    %319 = vmatpush1.bf16.msra.mxu0 0
    %320 = vmatprep.subr.bf16.mxu0 0
    %321 = vmatpush1.bf16.msra.mxu0 0
    %322 = vmatprep.subr.bf16.mxu0 0
    %323 = vmatpush1.bf16.msra.mxu0 0
    %324 = vmatprep.mubr.bf16.mxu0 0
    %325 = vmatmul.mubr.bf16.gmra.mrb[0].mxu0 %v290
    %v326 = vpop.f32.mrb[0].mxu0
    %v327 = vadd.f32 %v270, %v326
    %v328 = vpop.f32.mrb[0].mxu0
    %v329 = vpop.f32.mrb[0].mxu0
    %v330 = vadd.f32 %v270, %v329
    %v331 = vpop.f32.mrb[0].mxu0
    %332 = vdwg.mxu0
    %v333 = vpack.c.bf16 %v330, %v327
    %v334 = vld [vmem:[#allocation11] sm:$0xf]
    %v335 = vld [vmem:[#allocation11 + $0x4] sm:$0xf]
    %v336 = vld [vmem:[#allocation11 + $0x8] sm:$0xf]
    %v337 = vld [vmem:[#allocation11 + $0xc] sm:$0xf]
    %v338 = vld [vmem:[#allocation17] sm:$0x1]
    %v340 = vlaneseq
    %v341 = vshrl.u32 %v340, 7
    %v342 = vsub.s32 0, %v341
    %v343 = vrot.slane %v338, %v342
    %v347 = vunpack.c.l.b16 %v185
    %v348 = vunpack.c.l.b16 %v186
    %v349 = vpack.c.b16 %v348, %v347
    %v354 = vunpack.c.l.b16 %v334
    %v355 = vunpack.c.l.b16 %v335
    %v356 = vunpack.c.l.b16 %v336
    %v357 = vunpack.c.l.b16 %v337
    %v358 = vpack.c.b16 %v355, %v354
    %v359 = vpack.c.b16 %v357, %v356
    %v363 = vsel %vm215, %v349, 0
    %365 = vmatprep.subr.bf16.mxu0 0
    %366 = vmatpush1.bf16.msra.mxu0 %v358
    %367 = vmatprep.subr.bf16.mxu0 0
    %368 = vmatpush1.bf16.msra.mxu0 %v359
    %369 = vmatprep.subr.bf16.mxu0 0
    %370 = vmatpush1.bf16.msra.mxu0 0
    %371 = vmatprep.subr.bf16.mxu0 0
    %372 = vmatpush1.bf16.msra.mxu0 0
    %373 = vmatprep.subr.bf16.mxu0 0
    %374 = vmatpush1.bf16.msra.mxu0 0
    %375 = vmatprep.subr.bf16.mxu0 0
    %376 = vmatpush1.bf16.msra.mxu0 0
    %377 = vmatprep.subr.bf16.mxu0 0
    %378 = vmatpush1.bf16.msra.mxu0 0
    %379 = vmatprep.subr.bf16.mxu0 0
    %380 = vmatpush1.bf16.msra.mxu0 0
    %381 = vmatprep.subr.bf16.mxu0 0
    %382 = vmatpush1.bf16.msra.mxu0 0
    %383 = vmatprep.subr.bf16.mxu0 0
    %384 = vmatpush1.bf16.msra.mxu0 0
    %385 = vmatprep.subr.bf16.mxu0 0
    %386 = vmatpush1.bf16.msra.mxu0 0
    %387 = vmatprep.subr.bf16.mxu0 0
    %388 = vmatpush1.bf16.msra.mxu0 0
    %389 = vmatprep.subr.bf16.mxu0 0
    %390 = vmatpush1.bf16.msra.mxu0 0
    %391 = vmatprep.subr.bf16.mxu0 0
    %392 = vmatpush1.bf16.msra.mxu0 0
    %393 = vmatprep.subr.bf16.mxu0 0
    %394 = vmatpush1.bf16.msra.mxu0 0
    %395 = vmatprep.subr.bf16.mxu0 0
    %396 = vmatpush1.bf16.msra.mxu0 0
    %397 = vmatprep.mubr.bf16.mxu0 0
    %398 = vmatmul.mubr.bf16.gmra.mrb[0].mxu0 %v363
    %v399 = vpop.f32.mrb[0].mxu0
    %v400 = vadd.f32 %v343, %v399
    %v401 = vpop.f32.mrb[0].mxu0
    %v402 = vpop.f32.mrb[0].mxu0
    %v403 = vadd.f32 %v343, %v402
    %v404 = vpop.f32.mrb[0].mxu0
    %405 = vdwg.mxu0
    %v406 = vpack.c.bf16 %v403, %v400
    %v408 = vunpack.c.l.b16 %v260
    %v409 = vunpack.c.h.b16 %v260
    %v410 = vpack.c.b16 %v408, %v408
    %v411 = vpack.c.b16 %v409, %v409
    %v413 = vunpack.c.l.b16 %v333
    %v414 = vunpack.c.h.b16 %v333
    %v415 = vpack.c.b16 %v413, %v413
    %v416 = vpack.c.b16 %v414, %v414
    %v418 = vunpack.c.l.b16 %v406
    %v419 = vunpack.c.h.b16 %v406
    %v420 = vpack.c.b16 %v418, %v418
    %v421 = vpack.c.b16 %v419, %v419
    %vm422 = vcmask 64512
    %v424 = vsel %vm422, %v410, 0
    %v427 = vsel %vm422, %v415, 0
    %429 = vmatprep.subr.bf16.mxu0 0
    %430 = vmatpush1.bf16.xpose.msra.mxu0 %v427
    %431 = vmatprep.subr.bf16.mxu0 0
    %432 = vmatpush1.bf16.xpose.msra.mxu0 0
    %433 = vmatprep.subr.bf16.mxu0 0
    %434 = vmatpush1.bf16.xpose.msra.mxu0 0
    %435 = vmatprep.subr.bf16.mxu0 0
    %436 = vmatpush1.bf16.xpose.msra.mxu0 0
    %437 = vmatprep.subr.bf16.mxu0 0
    %438 = vmatpush1.bf16.xpose.msra.mxu0 0
    %439 = vmatprep.subr.bf16.mxu0 0
    %440 = vmatpush1.bf16.xpose.msra.mxu0 0
    %441 = vmatprep.subr.bf16.mxu0 0
    %442 = vmatpush1.bf16.xpose.msra.mxu0 0
    %443 = vmatprep.subr.bf16.mxu0 0
    %444 = vmatpush1.bf16.xpose.msra.mxu0 0
    %445 = vmatprep.subr.bf16.mxu0 0
    %446 = vmatpush1.bf16.xpose.msra.mxu0 0
    %447 = vmatprep.subr.bf16.mxu0 0
    %448 = vmatpush1.bf16.xpose.msra.mxu0 0
    %449 = vmatprep.subr.bf16.mxu0 0
    %450 = vmatpush1.bf16.xpose.msra.mxu0 0
    %451 = vmatprep.subr.bf16.mxu0 0
    %452 = vmatpush1.bf16.xpose.msra.mxu0 0
    %453 = vmatprep.subr.bf16.mxu0 0
    %454 = vmatpush1.bf16.xpose.msra.mxu0 0
    %455 = vmatprep.subr.bf16.mxu0 0
    %456 = vmatpush1.bf16.xpose.msra.mxu0 0
    %457 = vmatprep.subr.bf16.mxu0 0
    %458 = vmatpush1.bf16.xpose.msra.mxu0 0
    %459 = vmatprep.subr.bf16.mxu0 0
    %460 = vmatpush1.bf16.xpose.msra.mxu0 0
    %461 = vmatprep.mubr.bf16.mxu0 0
    %462 = vmatmul.mubr.bf16.gmra.mrb[0].mxu0 %v424
    %v463 = vpop.f32.mrb[0].mxu0
    %v464 = vadd.f32 0.0, %v463
    %v465 = vpop.f32.mrb[0].mxu0
    %v466 = vpop.f32.mrb[0].mxu0
    %v467 = vpop.f32.mrb[0].mxu0
    %468 = vdwg.mxu0
    %v470 = vsel %vm422, %v411, 0
    %v473 = vsel %vm422, %v416, 0
    %475 = vmatprep.subr.bf16.mxu0 0
    %476 = vmatpush1.bf16.xpose.msra.mxu0 %v473
    %477 = vmatprep.subr.bf16.mxu0 0
    %478 = vmatpush1.bf16.xpose.msra.mxu0 0
    %479 = vmatprep.subr.bf16.mxu0 0
    %480 = vmatpush1.bf16.xpose.msra.mxu0 0
    %481 = vmatprep.subr.bf16.mxu0 0
    %482 = vmatpush1.bf16.xpose.msra.mxu0 0
    %483 = vmatprep.subr.bf16.mxu0 0
    %484 = vmatpush1.bf16.xpose.msra.mxu0 0
    %485 = vmatprep.subr.bf16.mxu0 0
    %486 = vmatpush1.bf16.xpose.msra.mxu0 0
    %487 = vmatprep.subr.bf16.mxu0 0
    %488 = vmatpush1.bf16.xpose.msra.mxu0 0
    %489 = vmatprep.subr.bf16.mxu0 0
    %490 = vmatpush1.bf16.xpose.msra.mxu0 0
    %491 = vmatprep.subr.bf16.mxu0 0
    %492 = vmatpush1.bf16.xpose.msra.mxu0 0
    %493 = vmatprep.subr.bf16.mxu0 0
    %494 = vmatpush1.bf16.xpose.msra.mxu0 0
    %495 = vmatprep.subr.bf16.mxu0 0
    %496 = vmatpush1.bf16.xpose.msra.mxu0 0
    %497 = vmatprep.subr.bf16.mxu0 0
    %498 = vmatpush1.bf16.xpose.msra.mxu0 0
    %499 = vmatprep.subr.bf16.mxu0 0
    %500 = vmatpush1.bf16.xpose.msra.mxu0 0
    %501 = vmatprep.subr.bf16.mxu0 0
    %502 = vmatpush1.bf16.xpose.msra.mxu0 0
    %503 = vmatprep.subr.bf16.mxu0 0
    %504 = vmatpush1.bf16.xpose.msra.mxu0 0
    %505 = vmatprep.subr.bf16.mxu0 0
    %506 = vmatpush1.bf16.xpose.msra.mxu0 0
    %507 = vmatprep.mubr.bf16.mxu0 0
    %508 = vmatmul.mubr.bf16.gmra.mrb[0].mxu0 %v470
    %v509 = vpop.f32.mrb[0].mxu0
    %v510 = vadd.f32 0.0, %v509
    %v511 = vpop.f32.mrb[0].mxu0
    %v512 = vpop.f32.mrb[0].mxu0
    %v513 = vpop.f32.mrb[0].mxu0
    %514 = vdwg.mxu0
    %v515 = vsel %vm422, %v464, -inf
    %516 = vmax.xlane.f32.xlu0 %v515
    %v517 = vpop.xlane.xlu0 %516
    %v518 = vsel %vm422, %v510, -inf
    %519 = vmax.xlane.f32.xlu0 %v518
    %v520 = vpop.xlane.xlu0 %519
    %v521 = vsub.f32 %v464, %v517
    %v522 = vsub.f32 %v510, %v520
    %v523 = vmul.f32 %v521, 1.442695
    %v524 = vpow.pop %v523
    %v525 = vmul.f32 %v522, 1.442695
    %v526 = vpow.pop %v525
    %v527 = vsel %vm422, %v524, 0.0
    %528 = vadd.xlane.f32.xlu0 %v527
    %v529 = vpop.xlane.xlu0 %528
    %v530 = vsel %vm422, %v526, 0.0
    %531 = vadd.xlane.f32.xlu0 %v530
    %v532 = vpop.xlane.xlu0 %531
    %v533 = vrcp.pop %v529
    %v534 = vrcp.pop %v532
    %v535 = vmul.f32 %v524, %v533
    %v536 = vmul.f32 %v526, %v534
    %v537 = vpack.c.bf16 %v535, %v535
    %v538 = vpack.c.bf16 %v536, %v536
    %v540 = vsel %vm422, %v537, 0
    %vm542 = vcmask 1043456
    %v544 = vsel %vm542, %v420, 0
    %546 = vmatprep.subr.bf16.mxu0 0
    %547 = vmatpush1.bf16.msra.mxu0 %v544
    %548 = vmatprep.subr.bf16.mxu0 0
    %549 = vmatpush1.bf16.msra.mxu0 0
    %550 = vmatprep.subr.bf16.mxu0 0
    %551 = vmatpush1.bf16.msra.mxu0 0
    %552 = vmatprep.subr.bf16.mxu0 0
    %553 = vmatpush1.bf16.msra.mxu0 0
    %554 = vmatprep.subr.bf16.mxu0 0
    %555 = vmatpush1.bf16.msra.mxu0 0
    %556 = vmatprep.subr.bf16.mxu0 0
    %557 = vmatpush1.bf16.msra.mxu0 0
    %558 = vmatprep.subr.bf16.mxu0 0
    %559 = vmatpush1.bf16.msra.mxu0 0
    %560 = vmatprep.subr.bf16.mxu0 0
    %561 = vmatpush1.bf16.msra.mxu0 0
    %562 = vmatprep.subr.bf16.mxu0 0
    %563 = vmatpush1.bf16.msra.mxu0 0
    %564 = vmatprep.subr.bf16.mxu0 0
    %565 = vmatpush1.bf16.msra.mxu0 0
    %566 = vmatprep.subr.bf16.mxu0 0
    %567 = vmatpush1.bf16.msra.mxu0 0
    %568 = vmatprep.subr.bf16.mxu0 0
    %569 = vmatpush1.bf16.msra.mxu0 0
    %570 = vmatprep.subr.bf16.mxu0 0
    %571 = vmatpush1.bf16.msra.mxu0 0
    %572 = vmatprep.subr.bf16.mxu0 0
    %573 = vmatpush1.bf16.msra.mxu0 0
    %574 = vmatprep.subr.bf16.mxu0 0
    %575 = vmatpush1.bf16.msra.mxu0 0
    %576 = vmatprep.subr.bf16.mxu0 0
    %577 = vmatpush1.bf16.msra.mxu0 0
    %578 = vmatprep.mubr.bf16.mxu0 0
    %579 = vmatmul.mubr.bf16.gmra.mrb[0].mxu0 %v540
    %v580 = vpop.f32.mrb[0].mxu0
    %v581 = vadd.f32 0.0, %v580
    %v582 = vpop.f32.mrb[0].mxu0
    %v583 = vpop.f32.mrb[0].mxu0
    %v584 = vpop.f32.mrb[0].mxu0
    %585 = vdwg.mxu0
    %v587 = vsel %vm422, %v538, 0
    %v590 = vsel %vm542, %v421, 0
    %592 = vmatprep.subr.bf16.mxu0 0
    %593 = vmatpush1.bf16.msra.mxu0 %v590
    %594 = vmatprep.subr.bf16.mxu0 0
    %595 = vmatpush1.bf16.msra.mxu0 0
    %596 = vmatprep.subr.bf16.mxu0 0
    %597 = vmatpush1.bf16.msra.mxu0 0
    %598 = vmatprep.subr.bf16.mxu0 0
    %599 = vmatpush1.bf16.msra.mxu0 0
    %600 = vmatprep.subr.bf16.mxu0 0
    %601 = vmatpush1.bf16.msra.mxu0 0
    %602 = vmatprep.subr.bf16.mxu0 0
    %603 = vmatpush1.bf16.msra.mxu0 0
    %604 = vmatprep.subr.bf16.mxu0 0
    %605 = vmatpush1.bf16.msra.mxu0 0
    %606 = vmatprep.subr.bf16.mxu0 0
    %607 = vmatpush1.bf16.msra.mxu0 0
    %608 = vmatprep.subr.bf16.mxu0 0
    %609 = vmatpush1.bf16.msra.mxu0 0
    %610 = vmatprep.subr.bf16.mxu0 0
    %611 = vmatpush1.bf16.msra.mxu0 0
    %612 = vmatprep.subr.bf16.mxu0 0
    %613 = vmatpush1.bf16.msra.mxu0 0
    %614 = vmatprep.subr.bf16.mxu0 0
    %615 = vmatpush1.bf16.msra.mxu0 0
    %616 = vmatprep.subr.bf16.mxu0 0
    %617 = vmatpush1.bf16.msra.mxu0 0
    %618 = vmatprep.subr.bf16.mxu0 0
    %619 = vmatpush1.bf16.msra.mxu0 0
    %620 = vmatprep.subr.bf16.mxu0 0
    %621 = vmatpush1.bf16.msra.mxu0 0
    %622 = vmatprep.subr.bf16.mxu0 0
    %623 = vmatpush1.bf16.msra.mxu0 0
    %624 = vmatprep.mubr.bf16.mxu0 0
    %625 = vmatmul.mubr.bf16.gmra.mrb[0].mxu0 %v587
    %v626 = vpop.f32.mrb[0].mxu0
    %v627 = vadd.f32 0.0, %v626
    %v628 = vpop.f32.mrb[0].mxu0
    %v629 = vpop.f32.mrb[0].mxu0
    %v630 = vpop.f32.mrb[0].mxu0
    %631 = vdwg.mxu0
    %v632 = vpack.c.bf16 %v627, %v581
    %633 = vrot.lane.b32.xlu0 %v410, 120
    %v634 = vpop.permute.xlu0 %633
    %635 = vrot.lane.b32.xlu0 %v415, 120
    %v636 = vpop.permute.xlu0 %635
    %v638 = vsel %vm422, %v634, 0
    %v641 = vsel %vm422, %v636, 0
    %643 = vmatprep.subr.bf16.mxu0 0
    %644 = vmatpush1.bf16.xpose.msra.mxu0 %v641
    %645 = vmatprep.subr.bf16.mxu0 0
    %646 = vmatpush1.bf16.xpose.msra.mxu0 0
    %647 = vmatprep.subr.bf16.mxu0 0
    %648 = vmatpush1.bf16.xpose.msra.mxu0 0
    %649 = vmatprep.subr.bf16.mxu0 0
    %650 = vmatpush1.bf16.xpose.msra.mxu0 0
    %651 = vmatprep.subr.bf16.mxu0 0
    %652 = vmatpush1.bf16.xpose.msra.mxu0 0
    %653 = vmatprep.subr.bf16.mxu0 0
    %654 = vmatpush1.bf16.xpose.msra.mxu0 0
    %655 = vmatprep.subr.bf16.mxu0 0
    %656 = vmatpush1.bf16.xpose.msra.mxu0 0
    %657 = vmatprep.subr.bf16.mxu0 0
    %658 = vmatpush1.bf16.xpose.msra.mxu0 0
    %659 = vmatprep.subr.bf16.mxu0 0
    %660 = vmatpush1.bf16.xpose.msra.mxu0 0
    %661 = vmatprep.subr.bf16.mxu0 0
    %662 = vmatpush1.bf16.xpose.msra.mxu0 0
    %663 = vmatprep.subr.bf16.mxu0 0
    %664 = vmatpush1.bf16.xpose.msra.mxu0 0
    %665 = vmatprep.subr.bf16.mxu0 0
    %666 = vmatpush1.bf16.xpose.msra.mxu0 0
    %667 = vmatprep.subr.bf16.mxu0 0
    %668 = vmatpush1.bf16.xpose.msra.mxu0 0
    %669 = vmatprep.subr.bf16.mxu0 0
    %670 = vmatpush1.bf16.xpose.msra.mxu0 0
    %671 = vmatprep.subr.bf16.mxu0 0
    %672 = vmatpush1.bf16.xpose.msra.mxu0 0
    %673 = vmatprep.subr.bf16.mxu0 0
    %674 = vmatpush1.bf16.xpose.msra.mxu0 0
    %675 = vmatprep.mubr.bf16.mxu0 0
    %676 = vmatmul.mubr.bf16.gmra.mrb[0].mxu0 %v638
    %v677 = vpop.f32.mrb[0].mxu0
    %v678 = vadd.f32 0.0, %v677
    %v679 = vpop.f32.mrb[0].mxu0
    %v680 = vpop.f32.mrb[0].mxu0
    %v681 = vpop.f32.mrb[0].mxu0
    %682 = vdwg.mxu0
    %683 = vrot.lane.b32.xlu0 %v411, 120
    %v684 = vpop.permute.xlu0 %683
    %685 = vrot.lane.b32.xlu0 %v416, 120
    %v686 = vpop.permute.xlu0 %685
    %v688 = vsel %vm422, %v684, 0
    %v691 = vsel %vm422, %v686, 0
    %693 = vmatprep.subr.bf16.mxu0 0
    %694 = vmatpush1.bf16.xpose.msra.mxu0 %v691
    %695 = vmatprep.subr.bf16.mxu0 0
    %696 = vmatpush1.bf16.xpose.msra.mxu0 0
    %697 = vmatprep.subr.bf16.mxu0 0
    %698 = vmatpush1.bf16.xpose.msra.mxu0 0
    %699 = vmatprep.subr.bf16.mxu0 0
    %700 = vmatpush1.bf16.xpose.msra.mxu0 0
    %701 = vmatprep.subr.bf16.mxu0 0
    %702 = vmatpush1.bf16.xpose.msra.mxu0 0
    %703 = vmatprep.subr.bf16.mxu0 0
    %704 = vmatpush1.bf16.xpose.msra.mxu0 0
    %705 = vmatprep.subr.bf16.mxu0 0
    %706 = vmatpush1.bf16.xpose.msra.mxu0 0
    %707 = vmatprep.subr.bf16.mxu0 0
    %708 = vmatpush1.bf16.xpose.msra.mxu0 0
    %709 = vmatprep.subr.bf16.mxu0 0
    %710 = vmatpush1.bf16.xpose.msra.mxu0 0
    %711 = vmatprep.subr.bf16.mxu0 0
    %712 = vmatpush1.bf16.xpose.msra.mxu0 0
    %713 = vmatprep.subr.bf16.mxu0 0
    %714 = vmatpush1.bf16.xpose.msra.mxu0 0
    %715 = vmatprep.subr.bf16.mxu0 0
    %716 = vmatpush1.bf16.xpose.msra.mxu0 0
    %717 = vmatprep.subr.bf16.mxu0 0
    %718 = vmatpush1.bf16.xpose.msra.mxu0 0
    %719 = vmatprep.subr.bf16.mxu0 0
    %720 = vmatpush1.bf16.xpose.msra.mxu0 0
    %721 = vmatprep.subr.bf16.mxu0 0
    %722 = vmatpush1.bf16.xpose.msra.mxu0 0
    %723 = vmatprep.subr.bf16.mxu0 0
    %724 = vmatpush1.bf16.xpose.msra.mxu0 0
    %725 = vmatprep.mubr.bf16.mxu0 0
    %726 = vmatmul.mubr.bf16.gmra.mrb[0].mxu0 %v688
    %v727 = vpop.f32.mrb[0].mxu0
    %v728 = vadd.f32 0.0, %v727
    %v729 = vpop.f32.mrb[0].mxu0
    %v730 = vpop.f32.mrb[0].mxu0
    %v731 = vpop.f32.mrb[0].mxu0
    %732 = vdwg.mxu0
    %v733 = vsel %vm422, %v678, -inf
    %734 = vmax.xlane.f32.xlu0 %v733
    %v735 = vpop.xlane.xlu0 %734
    %v736 = vsel %vm422, %v728, -inf
    %737 = vmax.xlane.f32.xlu0 %v736
    %v738 = vpop.xlane.xlu0 %737
    %v739 = vsub.f32 %v678, %v735
    %v740 = vsub.f32 %v728, %v738
    %v741 = vmul.f32 %v739, 1.442695
    %v742 = vpow.pop %v741
    %v743 = vmul.f32 %v740, 1.442695
    %v744 = vpow.pop %v743
    %v745 = vsel %vm422, %v742, 0.0
    %746 = vadd.xlane.f32.xlu0 %v745
    %v747 = vpop.xlane.xlu0 %746
    %v748 = vsel %vm422, %v744, 0.0
    %749 = vadd.xlane.f32.xlu0 %v748
    %v750 = vpop.xlane.xlu0 %749
    %v751 = vrcp.pop %v747
    %v752 = vrcp.pop %v750
    %v753 = vmul.f32 %v742, %v751
    %v754 = vmul.f32 %v744, %v752
    %v755 = vpack.c.bf16 %v753, %v753
    %v756 = vpack.c.bf16 %v754, %v754
    %757 = vrot.lane.b32.xlu0 %v420, 120
    %v758 = vpop.permute.xlu0 %757
    %v760 = vsel %vm422, %v755, 0
    %v763 = vsel %vm542, %v758, 0
    %765 = vmatprep.subr.bf16.mxu0 0
    %766 = vmatpush1.bf16.msra.mxu0 %v763
    %767 = vmatprep.subr.bf16.mxu0 0
    %768 = vmatpush1.bf16.msra.mxu0 0
    %769 = vmatprep.subr.bf16.mxu0 0
    %770 = vmatpush1.bf16.msra.mxu0 0
    %771 = vmatprep.subr.bf16.mxu0 0
    %772 = vmatpush1.bf16.msra.mxu0 0
    %773 = vmatprep.subr.bf16.mxu0 0
    %774 = vmatpush1.bf16.msra.mxu0 0
    %775 = vmatprep.subr.bf16.mxu0 0
    %776 = vmatpush1.bf16.msra.mxu0 0
    %777 = vmatprep.subr.bf16.mxu0 0
    %778 = vmatpush1.bf16.msra.mxu0 0
    %779 = vmatprep.subr.bf16.mxu0 0
    %780 = vmatpush1.bf16.msra.mxu0 0
    %781 = vmatprep.subr.bf16.mxu0 0
    %782 = vmatpush1.bf16.msra.mxu0 0
    %783 = vmatprep.subr.bf16.mxu0 0
    %784 = vmatpush1.bf16.msra.mxu0 0
    %785 = vmatprep.subr.bf16.mxu0 0
    %786 = vmatpush1.bf16.msra.mxu0 0
    %787 = vmatprep.subr.bf16.mxu0 0
    %788 = vmatpush1.bf16.msra.mxu0 0
    %789 = vmatprep.subr.bf16.mxu0 0
    %790 = vmatpush1.bf16.msra.mxu0 0
    %791 = vmatprep.subr.bf16.mxu0 0
    %792 = vmatpush1.bf16.msra.mxu0 0
    %793 = vmatprep.subr.bf16.mxu0 0
    %794 = vmatpush1.bf16.msra.mxu0 0
    %795 = vmatprep.subr.bf16.mxu0 0
    %796 = vmatpush1.bf16.msra.mxu0 0
    %797 = vmatprep.mubr.bf16.mxu0 0
    %798 = vmatmul.mubr.bf16.gmra.mrb[0].mxu0 %v760
    %v799 = vpop.f32.mrb[0].mxu0
    %v800 = vadd.f32 0.0, %v799
    %v801 = vpop.f32.mrb[0].mxu0
    %v802 = vpop.f32.mrb[0].mxu0
    %v803 = vpop.f32.mrb[0].mxu0
    %804 = vdwg.mxu0
    %805 = vrot.lane.b32.xlu0 %v421, 120
    %v806 = vpop.permute.xlu0 %805
    %v808 = vsel %vm422, %v756, 0
    %v811 = vsel %vm542, %v806, 0
    %813 = vmatprep.subr.bf16.mxu0 0
    %814 = vmatpush1.bf16.msra.mxu0 %v811
    %815 = vmatprep.subr.bf16.mxu0 0
    %816 = vmatpush1.bf16.msra.mxu0 0
    %817 = vmatprep.subr.bf16.mxu0 0
    %818 = vmatpush1.bf16.msra.mxu0 0
    %819 = vmatprep.subr.bf16.mxu0 0
    %820 = vmatpush1.bf16.msra.mxu0 0
    %821 = vmatprep.subr.bf16.mxu0 0
    %822 = vmatpush1.bf16.msra.mxu0 0
    %823 = vmatprep.subr.bf16.mxu0 0
    %824 = vmatpush1.bf16.msra.mxu0 0
    %825 = vmatprep.subr.bf16.mxu0 0
    %826 = vmatpush1.bf16.msra.mxu0 0
    %827 = vmatprep.subr.bf16.mxu0 0
    %828 = vmatpush1.bf16.msra.mxu0 0
    %829 = vmatprep.subr.bf16.mxu0 0
    %830 = vmatpush1.bf16.msra.mxu0 0
    %831 = vmatprep.subr.bf16.mxu0 0
    %832 = vmatpush1.bf16.msra.mxu0 0
    %833 = vmatprep.subr.bf16.mxu0 0
    %834 = vmatpush1.bf16.msra.mxu0 0
    %835 = vmatprep.subr.bf16.mxu0 0
    %836 = vmatpush1.bf16.msra.mxu0 0
    %837 = vmatprep.subr.bf16.mxu0 0
    %838 = vmatpush1.bf16.msra.mxu0 0
    %839 = vmatprep.subr.bf16.mxu0 0
    %840 = vmatpush1.bf16.msra.mxu0 0
    %841 = vmatprep.subr.bf16.mxu0 0
    %842 = vmatpush1.bf16.msra.mxu0 0
    %843 = vmatprep.subr.bf16.mxu0 0
    %844 = vmatpush1.bf16.msra.mxu0 0
    %845 = vmatprep.mubr.bf16.mxu0 0
    %846 = vmatmul.mubr.bf16.gmra.mrb[0].mxu0 %v808
    %v847 = vpop.f32.mrb[0].mxu0
    %v848 = vadd.f32 0.0, %v847
    %v849 = vpop.f32.mrb[0].mxu0
    %v850 = vpop.f32.mrb[0].mxu0
    %v851 = vpop.f32.mrb[0].mxu0
    %852 = vdwg.mxu0
    %v853 = vpack.c.bf16 %v848, %v800
    %854 = vrot.lane.b32.xlu0 %v410, 112
    %v855 = vpop.permute.xlu0 %854
    %856 = vrot.lane.b32.xlu0 %v415, 112
    %v857 = vpop.permute.xlu0 %856
    %v859 = vsel %vm422, %v855, 0
    %v862 = vsel %vm422, %v857, 0
    %864 = vmatprep.subr.bf16.mxu0 0
    %865 = vmatpush1.bf16.xpose.msra.mxu0 %v862
    %866 = vmatprep.subr.bf16.mxu0 0
    %867 = vmatpush1.bf16.xpose.msra.mxu0 0
    %868 = vmatprep.subr.bf16.mxu0 0
    %869 = vmatpush1.bf16.xpose.msra.mxu0 0
    %870 = vmatprep.subr.bf16.mxu0 0
    %871 = vmatpush1.bf16.xpose.msra.mxu0 0
    %872 = vmatprep.subr.bf16.mxu0 0
    %873 = vmatpush1.bf16.xpose.msra.mxu0 0
    %874 = vmatprep.subr.bf16.mxu0 0
    %875 = vmatpush1.bf16.xpose.msra.mxu0 0
    %876 = vmatprep.subr.bf16.mxu0 0
    %877 = vmatpush1.bf16.xpose.msra.mxu0 0
    %878 = vmatprep.subr.bf16.mxu0 0
    %879 = vmatpush1.bf16.xpose.msra.mxu0 0
    %880 = vmatprep.subr.bf16.mxu0 0
    %881 = vmatpush1.bf16.xpose.msra.mxu0 0
    %882 = vmatprep.subr.bf16.mxu0 0
    %883 = vmatpush1.bf16.xpose.msra.mxu0 0
    %884 = vmatprep.subr.bf16.mxu0 0
    %885 = vmatpush1.bf16.xpose.msra.mxu0 0
    %886 = vmatprep.subr.bf16.mxu0 0
    %887 = vmatpush1.bf16.xpose.msra.mxu0 0
    %888 = vmatprep.subr.bf16.mxu0 0
    %889 = vmatpush1.bf16.xpose.msra.mxu0 0
    %890 = vmatprep.subr.bf16.mxu0 0
    %891 = vmatpush1.bf16.xpose.msra.mxu0 0
    %892 = vmatprep.subr.bf16.mxu0 0
    %893 = vmatpush1.bf16.xpose.msra.mxu0 0
    %894 = vmatprep.subr.bf16.mxu0 0
    %895 = vmatpush1.bf16.xpose.msra.mxu0 0
    %896 = vmatprep.mubr.bf16.mxu0 0
    %897 = vmatmul.mubr.bf16.gmra.mrb[0].mxu0 %v859
    %v898 = vpop.f32.mrb[0].mxu0
    %v899 = vadd.f32 0.0, %v898
    %v900 = vpop.f32.mrb[0].mxu0
    %v901 = vpop.f32.mrb[0].mxu0
    %v902 = vpop.f32.mrb[0].mxu0
    %903 = vdwg.mxu0
    %904 = vrot.lane.b32.xlu0 %v411, 112
    %v905 = vpop.permute.xlu0 %904
    %906 = vrot.lane.b32.xlu0 %v416, 112
    %v907 = vpop.permute.xlu0 %906
    %v909 = vsel %vm422, %v905, 0
    %v912 = vsel %vm422, %v907, 0
    %914 = vmatprep.subr.bf16.mxu0 0
    %915 = vmatpush1.bf16.xpose.msra.mxu0 %v912
    %916 = vmatprep.subr.bf16.mxu0 0
    %917 = vmatpush1.bf16.xpose.msra.mxu0 0
    %918 = vmatprep.subr.bf16.mxu0 0
    %919 = vmatpush1.bf16.xpose.msra.mxu0 0
    %920 = vmatprep.subr.bf16.mxu0 0
    %921 = vmatpush1.bf16.xpose.msra.mxu0 0
    %922 = vmatprep.subr.bf16.mxu0 0
    %923 = vmatpush1.bf16.xpose.msra.mxu0 0
    %924 = vmatprep.subr.bf16.mxu0 0
    %925 = vmatpush1.bf16.xpose.msra.mxu0 0
    %926 = vmatprep.subr.bf16.mxu0 0
    %927 = vmatpush1.bf16.xpose.msra.mxu0 0
    %928 = vmatprep.subr.bf16.mxu0 0
    %929 = vmatpush1.bf16.xpose.msra.mxu0 0
    %930 = vmatprep.subr.bf16.mxu0 0
    %931 = vmatpush1.bf16.xpose.msra.mxu0 0
    %932 = vmatprep.subr.bf16.mxu0 0
    %933 = vmatpush1.bf16.xpose.msra.mxu0 0
    %934 = vmatprep.subr.bf16.mxu0 0
    %935 = vmatpush1.bf16.xpose.msra.mxu0 0
    %936 = vmatprep.subr.bf16.mxu0 0
    %937 = vmatpush1.bf16.xpose.msra.mxu0 0
    %938 = vmatprep.subr.bf16.mxu0 0
    %939 = vmatpush1.bf16.xpose.msra.mxu0 0
    %940 = vmatprep.subr.bf16.mxu0 0
    %941 = vmatpush1.bf16.xpose.msra.mxu0 0
    %942 = vmatprep.subr.bf16.mxu0 0
    %943 = vmatpush1.bf16.xpose.msra.mxu0 0
    %944 = vmatprep.subr.bf16.mxu0 0
    %945 = vmatpush1.bf16.xpose.msra.mxu0 0
    %946 = vmatprep.mubr.bf16.mxu0 0
    %947 = vmatmul.mubr.bf16.gmra.mrb[0].mxu0 %v909
    %v948 = vpop.f32.mrb[0].mxu0
    %v949 = vadd.f32 0.0, %v948
    %v950 = vpop.f32.mrb[0].mxu0
    %v951 = vpop.f32.mrb[0].mxu0
    %v952 = vpop.f32.mrb[0].mxu0
    %953 = vdwg.mxu0
    %v954 = vsel %vm422, %v899, -inf
    %955 = vmax.xlane.f32.xlu0 %v954
    %v956 = vpop.xlane.xlu0 %955
    %v957 = vsel %vm422, %v949, -inf
    %958 = vmax.xlane.f32.xlu0 %v957
    %v959 = vpop.xlane.xlu0 %958
    %v960 = vsub.f32 %v899, %v956
    %v961 = vsub.f32 %v949, %v959
    %v962 = vmul.f32 %v960, 1.442695
    %v963 = vpow.pop %v962
    %v964 = vmul.f32 %v961, 1.442695
    %v965 = vpow.pop %v964
    %v966 = vsel %vm422, %v963, 0.0
    %967 = vadd.xlane.f32.xlu0 %v966
    %v968 = vpop.xlane.xlu0 %967
    %v969 = vsel %vm422, %v965, 0.0
    %970 = vadd.xlane.f32.xlu0 %v969
    %v971 = vpop.xlane.xlu0 %970
    %v972 = vrcp.pop %v968
    %v973 = vrcp.pop %v971
    %v974 = vmul.f32 %v963, %v972
    %v975 = vmul.f32 %v965, %v973
    %v976 = vpack.c.bf16 %v974, %v974
    %v977 = vpack.c.bf16 %v975, %v975
    %978 = vrot.lane.b32.xlu0 %v420, 112
    %v979 = vpop.permute.xlu0 %978
    %v981 = vsel %vm422, %v976, 0
    %v984 = vsel %vm542, %v979, 0
    %986 = vmatprep.subr.bf16.mxu0 0
    %987 = vmatpush1.bf16.msra.mxu0 %v984
    %988 = vmatprep.subr.bf16.mxu0 0
    %989 = vmatpush1.bf16.msra.mxu0 0
    %990 = vmatprep.subr.bf16.mxu0 0
    %991 = vmatpush1.bf16.msra.mxu0 0
    %992 = vmatprep.subr.bf16.mxu0 0
    %993 = vmatpush1.bf16.msra.mxu0 0
    %994 = vmatprep.subr.bf16.mxu0 0
    %995 = vmatpush1.bf16.msra.mxu0 0
    %996 = vmatprep.subr.bf16.mxu0 0
    %997 = vmatpush1.bf16.msra.mxu0 0
    %998 = vmatprep.subr.bf16.mxu0 0
    %999 = vmatpush1.bf16.msra.mxu0 0
    %1000 = vmatprep.subr.bf16.mxu0 0
    %1001 = vmatpush1.bf16.msra.mxu0 0
    %1002 = vmatprep.subr.bf16.mxu0 0
    %1003 = vmatpush1.bf16.msra.mxu0 0
    %1004 = vmatprep.subr.bf16.mxu0 0
    %1005 = vmatpush1.bf16.msra.mxu0 0
    %1006 = vmatprep.subr.bf16.mxu0 0
    %1007 = vmatpush1.bf16.msra.mxu0 0
    %1008 = vmatprep.subr.bf16.mxu0 0
    %1009 = vmatpush1.bf16.msra.mxu0 0
    %1010 = vmatprep.subr.bf16.mxu0 0
    %1011 = vmatpush1.bf16.msra.mxu0 0
    %1012 = vmatprep.subr.bf16.mxu0 0
    %1013 = vmatpush1.bf16.msra.mxu0 0
    %1014 = vmatprep.subr.bf16.mxu0 0
    %1015 = vmatpush1.bf16.msra.mxu0 0
    %1016 = vmatprep.subr.bf16.mxu0 0
    %1017 = vmatpush1.bf16.msra.mxu0 0
    %1018 = vmatprep.mubr.bf16.mxu0 0
    %1019 = vmatmul.mubr.bf16.gmra.mrb[0].mxu0 %v981
    %v1020 = vpop.f32.mrb[0].mxu0
    %v1021 = vadd.f32 0.0, %v1020
    %v1022 = vpop.f32.mrb[0].mxu0
    %v1023 = vpop.f32.mrb[0].mxu0
    %v1024 = vpop.f32.mrb[0].mxu0
    %1025 = vdwg.mxu0
    %1026 = vrot.lane.b32.xlu0 %v421, 112
    %v1027 = vpop.permute.xlu0 %1026
    %v1029 = vsel %vm422, %v977, 0
    %v1032 = vsel %vm542, %v1027, 0
    %1034 = vmatprep.subr.bf16.mxu0 0
    %1035 = vmatpush1.bf16.msra.mxu0 %v1032
    %1036 = vmatprep.subr.bf16.mxu0 0
    %1037 = vmatpush1.bf16.msra.mxu0 0
    %1038 = vmatprep.subr.bf16.mxu0 0
    %1039 = vmatpush1.bf16.msra.mxu0 0
    %1040 = vmatprep.subr.bf16.mxu0 0
    %1041 = vmatpush1.bf16.msra.mxu0 0
    %1042 = vmatprep.subr.bf16.mxu0 0
    %1043 = vmatpush1.bf16.msra.mxu0 0
    %1044 = vmatprep.subr.bf16.mxu0 0
    %1045 = vmatpush1.bf16.msra.mxu0 0
    %1046 = vmatprep.subr.bf16.mxu0 0
    %1047 = vmatpush1.bf16.msra.mxu0 0
    %1048 = vmatprep.subr.bf16.mxu0 0
    %1049 = vmatpush1.bf16.msra.mxu0 0
    %1050 = vmatprep.subr.bf16.mxu0 0
    %1051 = vmatpush1.bf16.msra.mxu0 0
    %1052 = vmatprep.subr.bf16.mxu0 0
    %1053 = vmatpush1.bf16.msra.mxu0 0
    %1054 = vmatprep.subr.bf16.mxu0 0
    %1055 = vmatpush1.bf16.msra.mxu0 0
    %1056 = vmatprep.subr.bf16.mxu0 0
    %1057 = vmatpush1.bf16.msra.mxu0 0
    %1058 = vmatprep.subr.bf16.mxu0 0
    %1059 = vmatpush1.bf16.msra.mxu0 0
    %1060 = vmatprep.subr.bf16.mxu0 0
    %1061 = vmatpush1.bf16.msra.mxu0 0
    %1062 = vmatprep.subr.bf16.mxu0 0
    %1063 = vmatpush1.bf16.msra.mxu0 0
    %1064 = vmatprep.subr.bf16.mxu0 0
    %1065 = vmatpush1.bf16.msra.mxu0 0
    %1066 = vmatprep.mubr.bf16.mxu0 0
    %1067 = vmatmul.mubr.bf16.gmra.mrb[0].mxu0 %v1029
    %v1068 = vpop.f32.mrb[0].mxu0
    %v1069 = vadd.f32 0.0, %v1068
    %v1070 = vpop.f32.mrb[0].mxu0
    %v1071 = vpop.f32.mrb[0].mxu0
    %v1072 = vpop.f32.mrb[0].mxu0
    %1073 = vdwg.mxu0
    %v1074 = vpack.c.bf16 %v1069, %v1021
    %1075 = vrot.lane.b32.xlu0 %v410, 104
    %v1076 = vpop.permute.xlu0 %1075
    %1077 = vrot.lane.b32.xlu0 %v415, 104
    %v1078 = vpop.permute.xlu0 %1077
    %v1080 = vsel %vm422, %v1076, 0
    %v1083 = vsel %vm422, %v1078, 0
    %1085 = vmatprep.subr.bf16.mxu0 0
    %1086 = vmatpush1.bf16.xpose.msra.mxu0 %v1083
    %1087 = vmatprep.subr.bf16.mxu0 0
    %1088 = vmatpush1.bf16.xpose.msra.mxu0 0
    %1089 = vmatprep.subr.bf16.mxu0 0
    %1090 = vmatpush1.bf16.xpose.msra.mxu0 0
    %1091 = vmatprep.subr.bf16.mxu0 0
    %1092 = vmatpush1.bf16.xpose.msra.mxu0 0
    %1093 = vmatprep.subr.bf16.mxu0 0
    %1094 = vmatpush1.bf16.xpose.msra.mxu0 0
    %1095 = vmatprep.subr.bf16.mxu0 0
    %1096 = vmatpush1.bf16.xpose.msra.mxu0 0
    %1097 = vmatprep.subr.bf16.mxu0 0
    %1098 = vmatpush1.bf16.xpose.msra.mxu0 0
    %1099 = vmatprep.subr.bf16.mxu0 0
    %1100 = vmatpush1.bf16.xpose.msra.mxu0 0
    %1101 = vmatprep.subr.bf16.mxu0 0
    %1102 = vmatpush1.bf16.xpose.msra.mxu0 0
    %1103 = vmatprep.subr.bf16.mxu0 0
    %1104 = vmatpush1.bf16.xpose.msra.mxu0 0
    %1105 = vmatprep.subr.bf16.mxu0 0
    %1106 = vmatpush1.bf16.xpose.msra.mxu0 0
    %1107 = vmatprep.subr.bf16.mxu0 0
    %1108 = vmatpush1.bf16.xpose.msra.mxu0 0
    %1109 = vmatprep.subr.bf16.mxu0 0
    %1110 = vmatpush1.bf16.xpose.msra.mxu0 0
    %1111 = vmatprep.subr.bf16.mxu0 0
    %1112 = vmatpush1.bf16.xpose.msra.mxu0 0
    %1113 = vmatprep.subr.bf16.mxu0 0
    %1114 = vmatpush1.bf16.xpose.msra.mxu0 0
    %1115 = vmatprep.subr.bf16.mxu0 0
    %1116 = vmatpush1.bf16.xpose.msra.mxu0 0
    %1117 = vmatprep.mubr.bf16.mxu0 0
    %1118 = vmatmul.mubr.bf16.gmra.mrb[0].mxu0 %v1080
    %v1119 = vpop.f32.mrb[0].mxu0
    %v1120 = vadd.f32 0.0, %v1119
    %v1121 = vpop.f32.mrb[0].mxu0
    %v1122 = vpop.f32.mrb[0].mxu0
    %v1123 = vpop.f32.mrb[0].mxu0
    %1124 = vdwg.mxu0
    %1125 = vrot.lane.b32.xlu0 %v411, 104
    %v1126 = vpop.permute.xlu0 %1125
    %1127 = vrot.lane.b32.xlu0 %v416, 104
    %v1128 = vpop.permute.xlu0 %1127
    %v1130 = vsel %vm422, %v1126, 0
    %v1133 = vsel %vm422, %v1128, 0
    %1135 = vmatprep.subr.bf16.mxu0 0
    %1136 = vmatpush1.bf16.xpose.msra.mxu0 %v1133
    %1137 = vmatprep.subr.bf16.mxu0 0
    %1138 = vmatpush1.bf16.xpose.msra.mxu0 0
    %1139 = vmatprep.subr.bf16.mxu0 0
    %1140 = vmatpush1.bf16.xpose.msra.mxu0 0
    %1141 = vmatprep.subr.bf16.mxu0 0
    %1142 = vmatpush1.bf16.xpose.msra.mxu0 0
    %1143 = vmatprep.subr.bf16.mxu0 0
    %1144 = vmatpush1.bf16.xpose.msra.mxu0 0
    %1145 = vmatprep.subr.bf16.mxu0 0
    %1146 = vmatpush1.bf16.xpose.msra.mxu0 0
    %1147 = vmatprep.subr.bf16.mxu0 0
    %1148 = vmatpush1.bf16.xpose.msra.mxu0 0
    %1149 = vmatprep.subr.bf16.mxu0 0
    %1150 = vmatpush1.bf16.xpose.msra.mxu0 0
    %1151 = vmatprep.subr.bf16.mxu0 0
    %1152 = vmatpush1.bf16.xpose.msra.mxu0 0
    %1153 = vmatprep.subr.bf16.mxu0 0
    %1154 = vmatpush1.bf16.xpose.msra.mxu0 0
    %1155 = vmatprep.subr.bf16.mxu0 0
    %1156 = vmatpush1.bf16.xpose.msra.mxu0 0
    %1157 = vmatprep.subr.bf16.mxu0 0
    %1158 = vmatpush1.bf16.xpose.msra.mxu0 0
    %1159 = vmatprep.subr.bf16.mxu0 0
    %1160 = vmatpush1.bf16.xpose.msra.mxu0 0
    %1161 = vmatprep.subr.bf16.mxu0 0
    %1162 = vmatpush1.bf16.xpose.msra.mxu0 0
    %1163 = vmatprep.subr.bf16.mxu0 0
    %1164 = vmatpush1.bf16.xpose.msra.mxu0 0
    %1165 = vmatprep.subr.bf16.mxu0 0
    %1166 = vmatpush1.bf16.xpose.msra.mxu0 0
    %1167 = vmatprep.mubr.bf16.mxu0 0
    %1168 = vmatmul.mubr.bf16.gmra.mrb[0].mxu0 %v1130
    %v1169 = vpop.f32.mrb[0].mxu0
    %v1170 = vadd.f32 0.0, %v1169
    %v1171 = vpop.f32.mrb[0].mxu0
    %v1172 = vpop.f32.mrb[0].mxu0
    %v1173 = vpop.f32.mrb[0].mxu0
    %1174 = vdwg.mxu0
    %v1175 = vsel %vm422, %v1120, -inf
    %1176 = vmax.xlane.f32.xlu0 %v1175
    %v1177 = vpop.xlane.xlu0 %1176
    %v1178 = vsel %vm422, %v1170, -inf
    %1179 = vmax.xlane.f32.xlu0 %v1178
    %v1180 = vpop.xlane.xlu0 %1179
    %v1181 = vsub.f32 %v1120, %v1177
    %v1182 = vsub.f32 %v1170, %v1180
    %v1183 = vmul.f32 %v1181, 1.442695
    %v1184 = vpow.pop %v1183
    %v1185 = vmul.f32 %v1182, 1.442695
    %v1186 = vpow.pop %v1185
    %v1187 = vsel %vm422, %v1184, 0.0
    %1188 = vadd.xlane.f32.xlu0 %v1187
    %v1189 = vpop.xlane.xlu0 %1188
    %v1190 = vsel %vm422, %v1186, 0.0
    %1191 = vadd.xlane.f32.xlu0 %v1190
    %v1192 = vpop.xlane.xlu0 %1191
    %v1193 = vrcp.pop %v1189
    %v1194 = vrcp.pop %v1192
    %v1195 = vmul.f32 %v1184, %v1193
    %v1196 = vmul.f32 %v1186, %v1194
    %v1197 = vpack.c.bf16 %v1195, %v1195
    %v1198 = vpack.c.bf16 %v1196, %v1196
    %1199 = vrot.lane.b32.xlu0 %v420, 104
    %v1200 = vpop.permute.xlu0 %1199
    %v1202 = vsel %vm422, %v1197, 0
    %v1205 = vsel %vm542, %v1200, 0
    %1207 = vmatprep.subr.bf16.mxu0 0
    %1208 = vmatpush1.bf16.msra.mxu0 %v1205
    %1209 = vmatprep.subr.bf16.mxu0 0
    %1210 = vmatpush1.bf16.msra.mxu0 0
    %1211 = vmatprep.subr.bf16.mxu0 0
    %1212 = vmatpush1.bf16.msra.mxu0 0
    %1213 = vmatprep.subr.bf16.mxu0 0
    %1214 = vmatpush1.bf16.msra.mxu0 0
    %1215 = vmatprep.subr.bf16.mxu0 0
    %1216 = vmatpush1.bf16.msra.mxu0 0
    %1217 = vmatprep.subr.bf16.mxu0 0
    %1218 = vmatpush1.bf16.msra.mxu0 0
    %1219 = vmatprep.subr.bf16.mxu0 0
    %1220 = vmatpush1.bf16.msra.mxu0 0
    %1221 = vmatprep.subr.bf16.mxu0 0
    %1222 = vmatpush1.bf16.msra.mxu0 0
    %1223 = vmatprep.subr.bf16.mxu0 0
    %1224 = vmatpush1.bf16.msra.mxu0 0
    %1225 = vmatprep.subr.bf16.mxu0 0
    %1226 = vmatpush1.bf16.msra.mxu0 0
    %1227 = vmatprep.subr.bf16.mxu0 0
    %1228 = vmatpush1.bf16.msra.mxu0 0
    %1229 = vmatprep.subr.bf16.mxu0 0
    %1230 = vmatpush1.bf16.msra.mxu0 0
    %1231 = vmatprep.subr.bf16.mxu0 0
    %1232 = vmatpush1.bf16.msra.mxu0 0
    %1233 = vmatprep.subr.bf16.mxu0 0
    %1234 = vmatpush1.bf16.msra.mxu0 0
    %1235 = vmatprep.subr.bf16.mxu0 0
    %1236 = vmatpush1.bf16.msra.mxu0 0
    %1237 = vmatprep.subr.bf16.mxu0 0
    %1238 = vmatpush1.bf16.msra.mxu0 0
    %1239 = vmatprep.mubr.bf16.mxu0 0
    %1240 = vmatmul.mubr.bf16.gmra.mrb[0].mxu0 %v1202
    %v1241 = vpop.f32.mrb[0].mxu0
    %v1242 = vadd.f32 0.0, %v1241
    %v1243 = vpop.f32.mrb[0].mxu0
    %v1244 = vpop.f32.mrb[0].mxu0
    %v1245 = vpop.f32.mrb[0].mxu0
    %1246 = vdwg.mxu0
    %1247 = vrot.lane.b32.xlu0 %v421, 104
    %v1248 = vpop.permute.xlu0 %1247
    %v1250 = vsel %vm422, %v1198, 0
    %v1253 = vsel %vm542, %v1248, 0
    %1255 = vmatprep.subr.bf16.mxu0 0
    %1256 = vmatpush1.bf16.msra.mxu0 %v1253
    %1257 = vmatprep.subr.bf16.mxu0 0
    %1258 = vmatpush1.bf16.msra.mxu0 0
    %1259 = vmatprep.subr.bf16.mxu0 0
    %1260 = vmatpush1.bf16.msra.mxu0 0
    %1261 = vmatprep.subr.bf16.mxu0 0
    %1262 = vmatpush1.bf16.msra.mxu0 0
    %1263 = vmatprep.subr.bf16.mxu0 0
    %1264 = vmatpush1.bf16.msra.mxu0 0
    %1265 = vmatprep.subr.bf16.mxu0 0
    %1266 = vmatpush1.bf16.msra.mxu0 0
    %1267 = vmatprep.subr.bf16.mxu0 0
    %1268 = vmatpush1.bf16.msra.mxu0 0
    %1269 = vmatprep.subr.bf16.mxu0 0
    %1270 = vmatpush1.bf16.msra.mxu0 0
    %1271 = vmatprep.subr.bf16.mxu0 0
    %1272 = vmatpush1.bf16.msra.mxu0 0
    %1273 = vmatprep.subr.bf16.mxu0 0
    %1274 = vmatpush1.bf16.msra.mxu0 0
    %1275 = vmatprep.subr.bf16.mxu0 0
    %1276 = vmatpush1.bf16.msra.mxu0 0
    %1277 = vmatprep.subr.bf16.mxu0 0
    %1278 = vmatpush1.bf16.msra.mxu0 0
    %1279 = vmatprep.subr.bf16.mxu0 0
    %1280 = vmatpush1.bf16.msra.mxu0 0
    %1281 = vmatprep.subr.bf16.mxu0 0
    %1282 = vmatpush1.bf16.msra.mxu0 0
    %1283 = vmatprep.subr.bf16.mxu0 0
    %1284 = vmatpush1.bf16.msra.mxu0 0
    %1285 = vmatprep.subr.bf16.mxu0 0
    %1286 = vmatpush1.bf16.msra.mxu0 0
    %1287 = vmatprep.mubr.bf16.mxu0 0
    %1288 = vmatmul.mubr.bf16.gmra.mrb[0].mxu0 %v1250
    %v1289 = vpop.f32.mrb[0].mxu0
    %v1290 = vadd.f32 0.0, %v1289
    %v1291 = vpop.f32.mrb[0].mxu0
    %v1292 = vpop.f32.mrb[0].mxu0
    %v1293 = vpop.f32.mrb[0].mxu0
    %1294 = vdwg.mxu0
    %v1295 = vpack.c.bf16 %v1290, %v1242
    %1297 = vrot.lane.b32.xlu0 %v853, 8
    %v1298 = vpop.permute.xlu0 %1297
    %1300 = vrot.lane.b32.xlu0 %v1074, 16
    %v1301 = vpop.permute.xlu0 %1300
    %1303 = vrot.lane.b32.xlu0 %v1295, 24
    %v1304 = vpop.permute.xlu0 %1303
    %v1307 = vsel %vm422, %v632, %v1298
    %vm1308 = vcmask 130048
    %v1310 = vsel %vm1308, %v1307, %v1301
    %vm1311 = vcmask 195584
    %v1313 = vsel %vm1311, %v1310, %v1304
    %v1314 = vld [vmem:[#allocation13] sm:$0xf]
    %v1315 = vld [vmem:[#allocation13 + $0x4] sm:$0xf]
    %v1316 = vld [vmem:[#allocation13 + $0x8] sm:$0xf]
    %v1317 = vld [vmem:[#allocation13 + $0xc] sm:$0xf]
    %v1318 = vld [vmem:[#allocation19] sm:$0x1]
    %v1320 = vlaneseq
    %v1321 = vshrl.u32 %v1320, 7
    %v1322 = vsub.s32 0, %v1321
    %v1323 = vrot.slane %v1318, %v1322
    %v1329 = vunpack.c.l.b16 %v1314
    %v1330 = vunpack.c.l.b16 %v1315
    %v1331 = vunpack.c.l.b16 %v1316
    %v1332 = vunpack.c.l.b16 %v1317
    %v1333 = vpack.c.b16 %v1330, %v1329
    %v1334 = vpack.c.b16 %v1332, %v1331
    %v1337 = vsel %vm215, %v1313, 0
    %1339 = vmatprep.subr.bf16.mxu0 0
    %1340 = vmatpush1.bf16.msra.mxu0 %v1333
    %1341 = vmatprep.subr.bf16.mxu0 0
    %1342 = vmatpush1.bf16.msra.mxu0 %v1334
    %1343 = vmatprep.subr.bf16.mxu0 0
    %1344 = vmatpush1.bf16.msra.mxu0 0
    %1345 = vmatprep.subr.bf16.mxu0 0
    %1346 = vmatpush1.bf16.msra.mxu0 0
    %1347 = vmatprep.subr.bf16.mxu0 0
    %1348 = vmatpush1.bf16.msra.mxu0 0
    %1349 = vmatprep.subr.bf16.mxu0 0
    %1350 = vmatpush1.bf16.msra.mxu0 0
    %1351 = vmatprep.subr.bf16.mxu0 0
    %1352 = vmatpush1.bf16.msra.mxu0 0
    %1353 = vmatprep.subr.bf16.mxu0 0
    %1354 = vmatpush1.bf16.msra.mxu0 0
    %1355 = vmatprep.subr.bf16.mxu0 0
    %1356 = vmatpush1.bf16.msra.mxu0 0
    %1357 = vmatprep.subr.bf16.mxu0 0
    %1358 = vmatpush1.bf16.msra.mxu0 0
    %1359 = vmatprep.subr.bf16.mxu0 0
    %1360 = vmatpush1.bf16.msra.mxu0 0
    %1361 = vmatprep.subr.bf16.mxu0 0
    %1362 = vmatpush1.bf16.msra.mxu0 0
    %1363 = vmatprep.subr.bf16.mxu0 0
    %1364 = vmatpush1.bf16.msra.mxu0 0
    %1365 = vmatprep.subr.bf16.mxu0 0
    %1366 = vmatpush1.bf16.msra.mxu0 0
    %1367 = vmatprep.subr.bf16.mxu0 0
    %1368 = vmatpush1.bf16.msra.mxu0 0
    %1369 = vmatprep.subr.bf16.mxu0 0
    %1370 = vmatpush1.bf16.msra.mxu0 0
    %1371 = vmatprep.mubr.bf16.mxu0 0
    %1372 = vmatmul.mubr.bf16.gmra.mrb[0].mxu0 %v1337
    %v1373 = vpop.f32.mrb[0].mxu0
    %v1374 = vadd.f32 %v1323, %v1373
    %v1375 = vpop.f32.mrb[0].mxu0
    %v1376 = vpop.f32.mrb[0].mxu0
    %v1377 = vadd.f32 %v1323, %v1376
    %v1378 = vpop.f32.mrb[0].mxu0
    %1379 = vdwg.mxu0
    %v1380 = vpack.c.bf16 %v1374, %v1374
    %v1381 = vpack.c.bf16 %v1377, %v1377
    %vm1382 = vcmask 257024
    %1383 = vst.msk [vmem:[#allocation20] sm:$0xf] %vm1382, %v1380
    %1384 = vst.msk [vmem:[#allocation20 + $0x4] sm:$0xf] %vm1382, %v1381
    // Predicated region
    $region90: #{tpu_custom_call.1} parent=1 // pred_check
      _
    $region91: #{tpu_custom_call.1} parent=1 // pred_check_branch
      %1386 = sbr.rel (0) target = $region93
    $region92: #{tpu_custom_call.1} parent=1 // pred_region
      %s1388 = ssub.s32 128, 128
      %1389 = vsyncadd [#allocation4], %s1388
      %s1390 = sshll.u32 [#allocation20], 4
      %s1391 = int_to_ptr.vmem [resolvable:$true] %s1390
      %1396 = dma.vmem_to_hbm [thread:$0]  %s1391, 128, %s11, [#allocation4], 64, 64, 4
    $region93: #{tpu_custom_call.1} parent=1 // pred_fallthru
      _
    // Predicated region
    $region94: #{tpu_custom_call.1} parent=1 // pred_check
      _
    $region95: #{tpu_custom_call.1} parent=1 // pred_check_branch
      %1398 = sbr.rel (0) target = $region97
    $region96: #{tpu_custom_call.1} parent=1 // pred_region
      %1399 = dma.done [#allocation4], 128
    $region97: #{tpu_custom_call.1} parent=1 // pred_fallthru
      _
    %1400 = vsyncpa [#allocation3], 1
    %1401 = vsyncpa [#allocation6], 1
    %1402 = vsyncpa [#allocation9], 1
    %1403 = vsyncpa [#allocation12], 1
    %1404 = vsyncpa [#allocation15], 1
    %1405 = vsyncpa [#allocation18], 1
    %1406 = vsyncpa [#allocation4], 1

</llo_original>
